<compile_context>
chip_gen: v7x
topology: tpu7x:2x2x1
jax: 0.10.0
libtpu: 0.0.40
codegen_flags: <defaults>
</compile_context>

<pallas_src>
import numpy as np
import jax
import jax.numpy as jnp
from jax.experimental import pallas as pl
from jax.experimental.pallas import tpu as pltpu

_EPS = 1e-5


def _make_kernel(Rout, WC, K, D, P, apply_mask):
    Rin = Rout + 2 * P

    def taps(ref2d):
        # Gather the K vertical taps as sublane-offset slices of a padded (Rin, WC)
        # ref and lay them side by side on the lane axis -> (Rout, K*WC).
        slabs = [ref2d[pl.ds(i * D, Rout), :] for i in range(K)]
        return slabs[0] if K == 1 else jnp.concatenate(slabs, axis=-1)

    def kernel(x_ref, mask_ref, w1_ref, b1_ref, w2_ref, b2_ref, out_ref, h1_ref):
        # conv1 + BN1 + ReLU : one MXU matmul, contraction K*WC
        h1 = jnp.dot(taps(x_ref), w1_ref[...], preferred_element_type=jnp.float32)
        h1 = jnp.maximum(h1 + b1_ref[...], 0.0)
        if apply_mask:                       # zero inter-batch halo rows (fused-batch mode)
            h1 = h1 * mask_ref[...]

        # Stage conv1 output in a vertically padded VMEM scratch (halo rows = 0)
        # so conv2's taps are plain sublane-offset loads as well.
        zeros_halo = jnp.zeros((P, WC), jnp.float32)
        h1_ref[pl.ds(0, P), :] = zeros_halo
        h1_ref[pl.ds(P + Rout, P), :] = zeros_halo
        h1_ref[pl.ds(P, Rout), :] = h1

        # conv2 + BN2 : one MXU matmul
        h2 = jnp.dot(taps(h1_ref), w2_ref[...], preferred_element_type=jnp.float32)
        h2 = h2 + b2_ref[...]

        # residual add (unpadded rows of x) + final ReLU
        out_ref[...] = jnp.maximum(h2 + x_ref[pl.ds(P, Rout), :], 0.0).astype(out_ref.dtype)

    return kernel


def _fold_bn(conv_bias, gamma, beta, mean, var):
    scale = gamma / jnp.sqrt(var + _EPS)
    bias = beta + (conv_bias - mean) * scale
    return scale, bias


def _build_col_weight(w_hwio, width, dilation, pad):
    """(K,K,Cin,Cout) HWIO -> (K, width*Cin, width*Cout) block-banded matrices.

    wcol[i, w_in*Cin + ci, w_out*Cout + co] = w[i, j, ci, co]
      where w_in = w_out + j*dilation - pad (at most one such j), else 0.
    Horizontal taps, channel mixing and horizontal zero-padding are all encoded
    here, so each conv needs only one matmul over the fused (tap, width, Cin) axis.
    """
    K, _, Cin, Cout = w_hwio.shape
    sel = np.zeros((K, width, width), np.float32)
    for j in range(K):
        for w_out in range(width):
            w_in = w_out + j * dilation - pad
            if 0 <= w_in < width:
                sel[j, w_in, w_out] = 1.0
    sel = jnp.asarray(sel)
    # Exact in f32: every product is 0 or an exact copy of w, and at most one
    # term per (w_in, w_out) pair is nonzero in the sum over j.
    wcol = jnp.sum(sel[None, :, :, None, :, None]
                   * w_hwio[:, :, None, :, None, :], axis=1)
    return wcol.reshape(K, width * Cin, width * Cout)


def _tensorcores_per_chip():
    """Best-effort TensorCores-per-chip query (v5e/v6e: 1; v7x & other megacore: 2)."""
    try:
        kind = jax.devices()[0].device_kind.lower()
    except Exception:
        return 2
    single_tc_tags = ("v5e", "v5 lite", "v5lite", "v6e", "v6 lite", "v6lite")
    return 1 if any(t in kind for t in single_tc_tags) else 2


def res_block_pallas(x_nchw, params1, params2, *, kernel_size, dilation,
                     batch_per_block=None):
    """ResBlock forward (eval-mode BN).

    x_nchw : (B, C, H, W) float32
    params : (w_hwio, conv_bias, gamma, beta, running_mean, running_var)
    batch_per_block : batch elements per grid step. None -> auto: fuse the whole
        batch on single-TC chips (v5e/v6e), keep a parallel per-batch grid on
        multi-TC chips (v7x).
    """
    B, C, H, W = x_nchw.shape
    K, D = kernel_size, dilation
    P = (D * (K - 1) + 1) // 2          # same padding formula as the PyTorch module
    assert 2 * P == D * (K - 1), "conv must preserve spatial size for the residual add"
    assert params1[0].shape == (K, K, C, C) and params2[0].shape == (K, K, C, C), \
        "residual add requires inplanes == planes"
    WC = W * C                          # lane axis; 128 for the test shape

    if batch_per_block is None:
        batch_per_block = B if _tensorcores_per_chip() == 1 else 1
    nb = max(1, min(B, batch_per_block))
    assert B % nb == 0, "batch_per_block must divide B"
    G = B // nb                         # grid size
    Hp = H + 2 * P                      # per-batch padded row count
    Rin = nb * Hp                       # padded rows per block
    Rout = Rin - 2 * P                  # conv output rows per block

    def prep(w, bconv, gamma, beta, mean, var):
        scale, bias = _fold_bn(bconv, gamma, beta, mean, var)
        wcol = _build_col_weight(w, W, D, P)                 # (K, WC, WC)
        wcol = wcol * jnp.tile(scale, W)[None, None, :]      # fold BN scale into weights
        wfused = wcol.reshape(K * WC, WC)                    # taps stacked on contraction
        blane = jnp.tile(bias, W).reshape(1, WC)             # lane-dense folded bias
        return wfused.astype(jnp.float32), blane.astype(jnp.float32)

    w1c, b1 = prep(*params1)
    w2c, b2 = prep(*params2)

    # NCHW -> lane-dense (B, H, W*C); pad rows with the conv halo; pack nb batch
    # elements per grid block (their private zero halos keep row taps batch-local).
    x2d = jnp.transpose(x_nchw, (0, 2, 3, 1)).astype(jnp.float32).reshape(B, H, WC)
    x_pad = jnp.pad(x2d, ((0, 0), (P, P), (0, 0)))           # (B, Hp, WC)
    x_blk = x_pad.reshape(G, Rin, WC)

    # Valid-row mask (zero on inter-batch halo rows of the fused output slab).
    mask_np = np.zeros((Rout, 1), np.float32)
    for m in range(nb):
        mask_np[m * Hp: m * Hp + H] = 1.0
    mask = jnp.asarray(mask_np)

    kernel = _make_kernel(Rout, WC, K, D, P, apply_mask=(nb > 1))

    flops = 2 * (2 * G * Rout * (K * WC) * WC)               # 2 convs, one matmul each
    bytes_accessed = 4 * (G * (Rin + Rout) * WC + 2 * K * WC * WC + 2 * WC + Rout)
    cost = pl.CostEstimate(flops=flops, transcendentals=0, bytes_accessed=bytes_accessed)

    def build(single_buffer_consts):
        # Constant weight/bias/mask inputs: single-buffer them (constant index_map,
        # a second pipeline buffer is pure waste). Fallback path omits pipeline_mode.
        ckw = dict(pipeline_mode=pl.Buffered(1)) if single_buffer_consts else {}
        grid_spec = pltpu.PrefetchScalarGridSpec(
            num_scalar_prefetch=0,
            grid=(G,),
            in_specs=[
                pl.BlockSpec((None, Rin, WC), lambda g: (g, 0, 0)),      # x (padded rows)
                pl.BlockSpec((Rout, 1), lambda g: (0, 0), **ckw),        # valid-row mask
                pl.BlockSpec((K * WC, WC), lambda g: (0, 0), **ckw),     # w1 (resident)
                pl.BlockSpec((1, WC), lambda g: (0, 0), **ckw),          # bias1
                pl.BlockSpec((K * WC, WC), lambda g: (0, 0), **ckw),     # w2 (resident)
                pl.BlockSpec((1, WC), lambda g: (0, 0), **ckw),          # bias2
            ],
            out_specs=pl.BlockSpec((None, Rout, WC), lambda g: (g, 0, 0)),
            scratch_shapes=[pltpu.VMEM((Rin, WC), jnp.float32)],         # padded h1
        )
        return pl.pallas_call(
            kernel,
            out_shape=jax.ShapeDtypeStruct((G, Rout, WC), jnp.float32),
            grid_spec=grid_spec,
            compiler_params=pltpu.CompilerParams(dimension_semantics=("parallel",)),
            cost_estimate=cost,
        )

    out_blk = None
    for single in (True, False):
        try:
            out_blk = build(single)(x_blk, mask, w1c, b1, w2c, b2)
            out_blk = jax.block_until_ready(out_blk)   # surface deferred errors here
            break
        except Exception:
            if not single:
                raise

    # Drop per-batch halo rows of fused blocks and restore NCHW.
    out_rows = jnp.pad(out_blk, ((0, 0), (0, 2 * P), (0, 0)))   # (G, nb*Hp, WC)
    out2d = out_rows.reshape(B, Hp, WC)[:, :H, :]               # (B, H, WC) real rows
    out_nhwc = out2d.reshape(B, H, W, C)
    return jnp.transpose(out_nhwc, (0, 3, 1, 2))                # back to NCHW


def _reference(x_nchw, params1, params2, *, kernel_size, dilation):
    """Pure-JAX reference mirroring PyTorch ResBlock (eval-mode BN)."""
    D = dilation
    P = (D * (kernel_size - 1) + 1) // 2

    def conv_bn(x, w_hwio, bconv, gamma, beta, mean, var):
        y = jax.lax.conv_general_dilated(
            x, w_hwio, window_strides=(1, 1),
            padding=[(P, P), (P, P)], rhs_dilation=(D, D),
            dimension_numbers=("NCHW", "HWIO", "NCHW"),
            precision=jax.lax.Precision.HIGHEST)
        y = y + bconv[None, :, None, None]
        s = gamma / jnp.sqrt(var + _EPS)
        return (y - mean[None, :, None, None]) * s[None, :, None, None] \
            + beta[None, :, None, None]

    out = jax.nn.relu(conv_bn(x_nchw, *params1))
    out = conv_bn(out, *params2)
    return jax.nn.relu(out + x_nchw)


if __name__ == "__main__":
    # ResBlock(inplanes=8, planes=8, size=3, dilated=2); W*C = 16*8 = 128 lanes.
    B, C, H, W = 2, 8, 16, 16
    K, D = 3, 2

    key = jax.random.PRNGKey(0)
    ks = jax.random.split(key, 12)

    def bn_conv_params(kw, kb, kg, kbe, km, kv):
        w = 0.1 * jax.random.normal(kw, (K, K, C, C), jnp.float32)       # HWIO
        bconv = 0.1 * jax.random.normal(kb, (C,), jnp.float32)
        gamma = 1.0 + 0.1 * jax.random.normal(kg, (C,), jnp.float32)
        beta = 0.1 * jax.random.normal(kbe, (C,), jnp.float32)
        mean = 0.1 * jax.random.normal(km, (C,), jnp.float32)
        var = jnp.abs(jax.random.normal(kv, (C,), jnp.float32)) + 0.5
        return w, bconv, gamma, beta, mean, var

    p1 = bn_conv_params(*ks[0:6])
    p2 = bn_conv_params(*ks[6:12])

    x = jax.random.normal(key, (B, C, H, W), jnp.float32)

    ref = _reference(x, p1, p2, kernel_size=K, dilation=D)

    # Exercise both grid strategies (per-batch parallel grid for multi-TC chips,
    # fully fused single grid step for single-TC chips), then the auto-selected one.
    for bpb in (1, B, None):
        out = res_block_pallas(x, p1, p2, kernel_size=K, dilation=D,
                               batch_per_block=bpb)
        out = jax.block_until_ready(out)
        assert out.shape == (B, C, H, W)
        err = jnp.max(jnp.abs(out - ref))
        assert jnp.allclose(out, ref, rtol=1e-4, atol=1e-4), \
            f"batch_per_block={bpb}: max err {err}"

    print("KERNEL_OK")
</pallas_src>

<mosaic_0001>
module attributes {stable_mosaic.version = 11 : i64} {
  func.func @kernel(%arg0: i32, %arg1: memref<1x20x128xf32, #tpu.memory_space<vmem>>, %arg2: memref<16x1xf32, #tpu.memory_space<vmem>>, %arg3: memref<384x128xf32, #tpu.memory_space<vmem>>, %arg4: memref<1x128xf32, #tpu.memory_space<vmem>>, %arg5: memref<384x128xf32, #tpu.memory_space<vmem>>, %arg6: memref<1x128xf32, #tpu.memory_space<vmem>>, %arg7: memref<1x16x128xf32, #tpu.memory_space<vmem>>, %arg8: memref<20x128xf32, #tpu.memory_space<vmem>>) attributes {dimension_semantics = [#tpu.dimension_semantics<parallel>], iteration_bounds = array<i64: 2>, scalar_prefetch = 0 : i64, scratch_operands = 1 : i64, tpu.core_type = #tpu.core_type<tc>, window_params = [{transform_indices = @transform_0, window_bounds = array<i64: 1, 20, 128>}, {pipeline_mode = #tpu.pipeline_mode<synchronous>, transform_indices = @transform_1, window_bounds = array<i64: 16, 1>}, {pipeline_mode = #tpu.pipeline_mode<synchronous>, transform_indices = @transform_2, window_bounds = array<i64: 384, 128>}, {pipeline_mode = #tpu.pipeline_mode<synchronous>, transform_indices = @transform_3, window_bounds = array<i64: 1, 128>}, {pipeline_mode = #tpu.pipeline_mode<synchronous>, transform_indices = @transform_4, window_bounds = array<i64: 384, 128>}, {pipeline_mode = #tpu.pipeline_mode<synchronous>, transform_indices = @transform_5, window_bounds = array<i64: 1, 128>}, {transform_indices = @transform_6, window_bounds = array<i64: 1, 16, 128>}]} {
    %c0 = arith.constant 0 : index
    %c0_0 = arith.constant 0 : index
    %c0_1 = arith.constant 0 : index
    %0 = vector.load %arg1[%c0, %c0_0, %c0_1] : memref<1x20x128xf32, #tpu.memory_space<vmem>>, vector<1x16x128xf32>
    %1 = vector.shape_cast %0 : vector<1x16x128xf32> to vector<16x128xf32>
    %c0_2 = arith.constant 0 : index
    %c2 = arith.constant 2 : index
    %c0_3 = arith.constant 0 : index
    %2 = vector.load %arg1[%c0_2, %c2, %c0_3] : memref<1x20x128xf32, #tpu.memory_space<vmem>>, vector<1x16x128xf32>
    %3 = vector.shape_cast %2 : vector<1x16x128xf32> to vector<16x128xf32>
    %c0_4 = arith.constant 0 : index
    %c4 = arith.constant 4 : index
    %c0_5 = arith.constant 0 : index
    %4 = vector.load %arg1[%c0_4, %c4, %c0_5] : memref<1x20x128xf32, #tpu.memory_space<vmem>>, vector<1x16x128xf32>
    %5 = vector.shape_cast %4 : vector<1x16x128xf32> to vector<16x128xf32>
    %6 = tpu.concatenate %1, %3, %5 in 1 : vector<16x128xf32>, vector<16x128xf32>, vector<16x128xf32> -> vector<16x384xf32>
    %c0_6 = arith.constant 0 : index
    %c0_7 = arith.constant 0 : index
    %7 = vector.load %arg3[%c0_6, %c0_7] : memref<384x128xf32, #tpu.memory_space<vmem>>, vector<384x128xf32>
    %cst = arith.constant dense<0.000000e+00> : vector<16x128xf32>
    %8 = tpu.matmul %6, %7, %cst {dimension_numbers = #tpu.dot_dimension_numbers<[1], [0], [0], [1], [0, 0, 1, 1], [], []>} : vector<16x384xf32>, vector<384x128xf32>, vector<16x128xf32> -> vector<16x128xf32>
    %c0_8 = arith.constant 0 : index
    %c0_9 = arith.constant 0 : index
    %9 = vector.load %arg4[%c0_8, %c0_9] : memref<1x128xf32, #tpu.memory_space<vmem>>, vector<1x128xf32>
    %10 = vector.broadcast %9 : vector<1x128xf32> to vector<16x128xf32>
    %11 = arith.addf %8, %10 : vector<16x128xf32>
    %cst_10 = arith.constant 0.000000e+00 : f32
    %12 = vector.broadcast %cst_10 : f32 to vector<16x128xf32>
    %13 = arith.maximumf %11, %12 : vector<16x128xf32>
    %cst_11 = arith.constant 0.000000e+00 : f32
    %14 = vector.broadcast %cst_11 : f32 to vector<2x128xf32>
    %c0_12 = arith.constant 0 : index
    %c0_13 = arith.constant 0 : index
    %15 = vector.load %arg8[%c0_12, %c0_13] : memref<20x128xf32, #tpu.memory_space<vmem>>, vector<2x128xf32>
    tpu.vector_store %arg8[%c0_12, %c0_13], %14 {strides = array<i32>} : memref<20x128xf32, #tpu.memory_space<vmem>>, vector<2x128xf32>,
    %c18 = arith.constant 18 : index
    %c0_14 = arith.constant 0 : index
    %16 = vector.load %arg8[%c18, %c0_14] : memref<20x128xf32, #tpu.memory_space<vmem>>, vector<2x128xf32>
    tpu.vector_store %arg8[%c18, %c0_14], %14 {strides = array<i32>} : memref<20x128xf32, #tpu.memory_space<vmem>>, vector<2x128xf32>,
    %c2_15 = arith.constant 2 : index
    %c0_16 = arith.constant 0 : index
    %17 = vector.load %arg8[%c2_15, %c0_16] : memref<20x128xf32, #tpu.memory_space<vmem>>, vector<16x128xf32>
    tpu.vector_store %arg8[%c2_15, %c0_16], %13 {strides = array<i32>} : memref<20x128xf32, #tpu.memory_space<vmem>>, vector<16x128xf32>,
    %c0_17 = arith.constant 0 : index
    %c0_18 = arith.constant 0 : index
    %18 = vector.load %arg8[%c0_17, %c0_18] : memref<20x128xf32, #tpu.memory_space<vmem>>, vector<16x128xf32>
    %c2_19 = arith.constant 2 : index
    %c0_20 = arith.constant 0 : index
    %19 = vector.load %arg8[%c2_19, %c0_20] : memref<20x128xf32, #tpu.memory_space<vmem>>, vector<16x128xf32>
    %c4_21 = arith.constant 4 : index
    %c0_22 = arith.constant 0 : index
    %20 = vector.load %arg8[%c4_21, %c0_22] : memref<20x128xf32, #tpu.memory_space<vmem>>, vector<16x128xf32>
    %21 = tpu.concatenate %18, %19, %20 in 1 : vector<16x128xf32>, vector<16x128xf32>, vector<16x128xf32> -> vector<16x384xf32>
    %c0_23 = arith.constant 0 : index
    %c0_24 = arith.constant 0 : index
    %22 = vector.load %arg5[%c0_23, %c0_24] : memref<384x128xf32, #tpu.memory_space<vmem>>, vector<384x128xf32>
    %cst_25 = arith.constant dense<0.000000e+00> : vector<16x128xf32>
    %23 = tpu.matmul %21, %22, %cst_25 {dimension_numbers = #tpu.dot_dimension_numbers<[1], [0], [0], [1], [0, 0, 1, 1], [], []>} : vector<16x384xf32>, vector<384x128xf32>, vector<16x128xf32> -> vector<16x128xf32>
    %c0_26 = arith.constant 0 : index
    %c0_27 = arith.constant 0 : index
    %24 = vector.load %arg6[%c0_26, %c0_27] : memref<1x128xf32, #tpu.memory_space<vmem>>, vector<1x128xf32>
    %25 = vector.broadcast %24 : vector<1x128xf32> to vector<16x128xf32>
    %26 = arith.addf %23, %25 : vector<16x128xf32>
    %c0_28 = arith.constant 0 : index
    %c2_29 = arith.constant 2 : index
    %c0_30 = arith.constant 0 : index
    %27 = vector.load %arg1[%c0_28, %c2_29, %c0_30] : memref<1x20x128xf32, #tpu.memory_space<vmem>>, vector<1x16x128xf32>
    %28 = vector.shape_cast %27 : vector<1x16x128xf32> to vector<16x128xf32>
    %29 = arith.addf %26, %28 : vector<16x128xf32>
    %cst_31 = arith.constant 0.000000e+00 : f32
    %30 = vector.broadcast %cst_31 : f32 to vector<16x128xf32>
    %31 = arith.maximumf %29, %30 : vector<16x128xf32>
    %c0_32 = arith.constant 0 : index
    %c0_33 = arith.constant 0 : index
    %c0_34 = arith.constant 0 : index
    %32 = vector.load %arg7[%c0_32, %c0_33, %c0_34] : memref<1x16x128xf32, #tpu.memory_space<vmem>>, vector<1x16x128xf32>
    %33 = vector.shape_cast %32 : vector<1x16x128xf32> to vector<16x128xf32>
    %34 = vector.shape_cast %31 : vector<16x128xf32> to vector<1x16x128xf32>
    tpu.vector_store %arg7[%c0_32, %c0_33, %c0_34], %34 {strides = array<i32>} : memref<1x16x128xf32, #tpu.memory_space<vmem>>, vector<1x16x128xf32>,
    return
  }
  func.func @transform_0(%arg0: i32) -> (i32, i32, i32) {
    %c0_i32 = arith.constant 0 : i32
    %c0_i32_0 = arith.constant 0 : i32
    %c0_i32_1 = arith.constant 0 : i32
    return %arg0, %c0_i32, %c0_i32_0 : i32, i32, i32
  }
  func.func @transform_1(%arg0: i32) -> (i32, i32) {
    %c0_i32 = arith.constant 0 : i32
    %c0_i32_0 = arith.constant 0 : i32
    %c0_i32_1 = arith.constant 0 : i32
    return %c0_i32, %c0_i32_0 : i32, i32
  }
  func.func @transform_2(%arg0: i32) -> (i32, i32) {
    %c0_i32 = arith.constant 0 : i32
    %c0_i32_0 = arith.constant 0 : i32
    %c0_i32_1 = arith.constant 0 : i32
    return %c0_i32, %c0_i32_0 : i32, i32
  }
  func.func @transform_3(%arg0: i32) -> (i32, i32) {
    %c0_i32 = arith.constant 0 : i32
    %c0_i32_0 = arith.constant 0 : i32
    %c0_i32_1 = arith.constant 0 : i32
    return %c0_i32, %c0_i32_0 : i32, i32
  }
  func.func @transform_4(%arg0: i32) -> (i32, i32) {
    %c0_i32 = arith.constant 0 : i32
    %c0_i32_0 = arith.constant 0 : i32
    %c0_i32_1 = arith.constant 0 : i32
    return %c0_i32, %c0_i32_0 : i32, i32
  }
  func.func @transform_5(%arg0: i32) -> (i32, i32) {
    %c0_i32 = arith.constant 0 : i32
    %c0_i32_0 = arith.constant 0 : i32
    %c0_i32_1 = arith.constant 0 : i32
    return %c0_i32, %c0_i32_0 : i32, i32
  }
  func.func @transform_6(%arg0: i32) -> (i32, i32, i32) {
    %c0_i32 = arith.constant 0 : i32
    %c0_i32_0 = arith.constant 0 : i32
    %c0_i32_1 = arith.constant 0 : i32
    return %arg0, %c0_i32, %c0_i32_0 : i32, i32, i32
  }
}

module attributes {stable_mosaic.version = 11 : i64} {
  func.func @kernel(%arg0: i32, %arg1: memref<1x20x128xf32, #tpu.memory_space<vmem>>, %arg2: memref<16x1xf32, #tpu.memory_space<vmem>>, %arg3: memref<384x128xf32, #tpu.memory_space<vmem>>, %arg4: memref<1x128xf32, #tpu.memory_space<vmem>>, %arg5: memref<384x128xf32, #tpu.memory_space<vmem>>, %arg6: memref<1x128xf32, #tpu.memory_space<vmem>>, %arg7: memref<1x16x128xf32, #tpu.memory_space<vmem>>, %arg8: memref<20x128xf32, #tpu.memory_space<vmem>>) attributes {dimension_semantics = [#tpu.dimension_semantics<parallel>], iteration_bounds = array<i64: 2>, scalar_prefetch = 0 : i64, scratch_operands = 1 : i64, tpu.core_type = #tpu.core_type<tc>, window_params = [{transform_indices = @transform_0, window_bounds = array<i64: 1, 20, 128>}, {pipeline_mode = #tpu.pipeline_mode<synchronous>, transform_indices = @transform_1, window_bounds = array<i64: 16, 1>}, {pipeline_mode = #tpu.pipeline_mode<synchronous>, transform_indices = @transform_2, window_bounds = array<i64: 384, 128>}, {pipeline_mode = #tpu.pipeline_mode<synchronous>, transform_indices = @transform_3, window_bounds = array<i64: 1, 128>}, {pipeline_mode = #tpu.pipeline_mode<synchronous>, transform_indices = @transform_4, window_bounds = array<i64: 384, 128>}, {pipeline_mode = #tpu.pipeline_mode<synchronous>, transform_indices = @transform_5, window_bounds = array<i64: 1, 128>}, {transform_indices = @transform_6, window_bounds = array<i64: 1, 16, 128>}]} {
    %c0 = arith.constant 0 : index
    %c0_0 = arith.constant 0 : index
    %c0_1 = arith.constant 0 : index
    %0 = vector.load %arg1[%c0, %c0_0, %c0_1] : memref<1x20x128xf32, #tpu.memory_space<vmem>>, vector<1x16x128xf32>
    %1 = vector.shape_cast %0 : vector<1x16x128xf32> to vector<16x128xf32>
    %c0_2 = arith.constant 0 : index
    %c2 = arith.constant 2 : index
    %c0_3 = arith.constant 0 : index
    %2 = vector.load %arg1[%c0_2, %c2, %c0_3] : memref<1x20x128xf32, #tpu.memory_space<vmem>>, vector<1x16x128xf32>
    %3 = vector.shape_cast %2 : vector<1x16x128xf32> to vector<16x128xf32>
    %c0_4 = arith.constant 0 : index
    %c4 = arith.constant 4 : index
    %c0_5 = arith.constant 0 : index
    %4 = vector.load %arg1[%c0_4, %c4, %c0_5] : memref<1x20x128xf32, #tpu.memory_space<vmem>>, vector<1x16x128xf32>
    %5 = vector.shape_cast %4 : vector<1x16x128xf32> to vector<16x128xf32>
    %6 = tpu.concatenate %1, %3, %5 in 1 : vector<16x128xf32>, vector<16x128xf32>, vector<16x128xf32> -> vector<16x384xf32>
    %c0_6 = arith.constant 0 : index
    %c0_7 = arith.constant 0 : index
    %7 = vector.load %arg3[%c0_6, %c0_7] : memref<384x128xf32, #tpu.memory_space<vmem>>, vector<384x128xf32>
    %cst = arith.constant dense<0.000000e+00> : vector<16x128xf32>
    %8 = tpu.matmul %6, %7, %cst {dimension_numbers = #tpu.dot_dimension_numbers<[1], [0], [0], [1], [0, 0, 1, 1], [], []>} : vector<16x384xf32>, vector<384x128xf32>, vector<16x128xf32> -> vector<16x128xf32>
    %c0_8 = arith.constant 0 : index
    %c0_9 = arith.constant 0 : index
    %9 = vector.load %arg4[%c0_8, %c0_9] : memref<1x128xf32, #tpu.memory_space<vmem>>, vector<1x128xf32>
    %10 = vector.broadcast %9 : vector<1x128xf32> to vector<16x128xf32>
    %11 = arith.addf %8, %10 : vector<16x128xf32>
    %cst_10 = arith.constant 0.000000e+00 : f32
    %12 = vector.broadcast %cst_10 : f32 to vector<16x128xf32>
    %13 = arith.maximumf %11, %12 : vector<16x128xf32>
    %cst_11 = arith.constant 0.000000e+00 : f32
    %14 = vector.broadcast %cst_11 : f32 to vector<2x128xf32>
    %c0_12 = arith.constant 0 : index
    %c0_13 = arith.constant 0 : index
    %15 = vector.load %arg8[%c0_12, %c0_13] : memref<20x128xf32, #tpu.memory_space<vmem>>, vector<2x128xf32>
    tpu.vector_store %arg8[%c0_12, %c0_13], %14 {strides = array<i32>} : memref<20x128xf32, #tpu.memory_space<vmem>>, vector<2x128xf32>,
    %c18 = arith.constant 18 : index
    %c0_14 = arith.constant 0 : index
    %16 = vector.load %arg8[%c18, %c0_14] : memref<20x128xf32, #tpu.memory_space<vmem>>, vector<2x128xf32>
    tpu.vector_store %arg8[%c18, %c0_14], %14 {strides = array<i32>} : memref<20x128xf32, #tpu.memory_space<vmem>>, vector<2x128xf32>,
    %c2_15 = arith.constant 2 : index
    %c0_16 = arith.constant 0 : index
    %17 = vector.load %arg8[%c2_15, %c0_16] : memref<20x128xf32, #tpu.memory_space<vmem>>, vector<16x128xf32>
    tpu.vector_store %arg8[%c2_15, %c0_16], %13 {strides = array<i32>} : memref<20x128xf32, #tpu.memory_space<vmem>>, vector<16x128xf32>,
    %c0_17 = arith.constant 0 : index
    %c0_18 = arith.constant 0 : index
    %18 = vector.load %arg8[%c0_17, %c0_18] : memref<20x128xf32, #tpu.memory_space<vmem>>, vector<16x128xf32>
    %c2_19 = arith.constant 2 : index
    %c0_20 = arith.constant 0 : index
    %19 = vector.load %arg8[%c2_19, %c0_20] : memref<20x128xf32, #tpu.memory_space<vmem>>, vector<16x128xf32>
    %c4_21 = arith.constant 4 : index
    %c0_22 = arith.constant 0 : index
    %20 = vector.load %arg8[%c4_21, %c0_22] : memref<20x128xf32, #tpu.memory_space<vmem>>, vector<16x128xf32>
    %21 = tpu.concatenate %18, %19, %20 in 1 : vector<16x128xf32>, vector<16x128xf32>, vector<16x128xf32> -> vector<16x384xf32>
    %c0_23 = arith.constant 0 : index
    %c0_24 = arith.constant 0 : index
    %22 = vector.load %arg5[%c0_23, %c0_24] : memref<384x128xf32, #tpu.memory_space<vmem>>, vector<384x128xf32>
    %cst_25 = arith.constant dense<0.000000e+00> : vector<16x128xf32>
    %23 = tpu.matmul %21, %22, %cst_25 {dimension_numbers = #tpu.dot_dimension_numbers<[1], [0], [0], [1], [0, 0, 1, 1], [], []>} : vector<16x384xf32>, vector<384x128xf32>, vector<16x128xf32> -> vector<16x128xf32>
    %c0_26 = arith.constant 0 : index
    %c0_27 = arith.constant 0 : index
    %24 = vector.load %arg6[%c0_26, %c0_27] : memref<1x128xf32, #tpu.memory_space<vmem>>, vector<1x128xf32>
    %25 = vector.broadcast %24 : vector<1x128xf32> to vector<16x128xf32>
    %26 = arith.addf %23, %25 : vector<16x128xf32>
    %c0_28 = arith.constant 0 : index
    %c2_29 = arith.constant 2 : index
    %c0_30 = arith.constant 0 : index
    %27 = vector.load %arg1[%c0_28, %c2_29, %c0_30] : memref<1x20x128xf32, #tpu.memory_space<vmem>>, vector<1x16x128xf32>
    %28 = vector.shape_cast %27 : vector<1x16x128xf32> to vector<16x128xf32>
    %29 = arith.addf %26, %28 : vector<16x128xf32>
    %cst_31 = arith.constant 0.000000e+00 : f32
    %30 = vector.broadcast %cst_31 : f32 to vector<16x128xf32>
    %31 = arith.maximumf %29, %30 : vector<16x128xf32>
    %c0_32 = arith.constant 0 : index
    %c0_33 = arith.constant 0 : index
    %c0_34 = arith.constant 0 : index
    %32 = vector.load %arg7[%c0_32, %c0_33, %c0_34] : memref<1x16x128xf32, #tpu.memory_space<vmem>>, vector<1x16x128xf32>
    %33 = vector.shape_cast %32 : vector<1x16x128xf32> to vector<16x128xf32>
    %34 = vector.shape_cast %31 : vector<16x128xf32> to vector<1x16x128xf32>
    tpu.vector_store %arg7[%c0_32, %c0_33, %c0_34], %34 {strides = array<i32>} : memref<1x16x128xf32, #tpu.memory_space<vmem>>, vector<1x16x128xf32>,
    return
  }
  func.func @transform_0(%arg0: i32) -> (i32, i32, i32) {
    %c0_i32 = arith.constant 0 : i32
    %c0_i32_0 = arith.constant 0 : i32
    %c0_i32_1 = arith.constant 0 : i32
    return %arg0, %c0_i32, %c0_i32_0 : i32, i32, i32
  }
  func.func @transform_1(%arg0: i32) -> (i32, i32) {
    %c0_i32 = arith.constant 0 : i32
    %c0_i32_0 = arith.constant 0 : i32
    %c0_i32_1 = arith.constant 0 : i32
    return %c0_i32, %c0_i32_0 : i32, i32
  }
  func.func @transform_2(%arg0: i32) -> (i32, i32) {
    %c0_i32 = arith.constant 0 : i32
    %c0_i32_0 = arith.constant 0 : i32
    %c0_i32_1 = arith.constant 0 : i32
    return %c0_i32, %c0_i32_0 : i32, i32
  }
  func.func @transform_3(%arg0: i32) -> (i32, i32) {
    %c0_i32 = arith.constant 0 : i32
    %c0_i32_0 = arith.constant 0 : i32
    %c0_i32_1 = arith.constant 0 : i32
    return %c0_i32, %c0_i32_0 : i32, i32
  }
  func.func @transform_4(%arg0: i32) -> (i32, i32) {
    %c0_i32 = arith.constant 0 : i32
    %c0_i32_0 = arith.constant 0 : i32
    %c0_i32_1 = arith.constant 0 : i32
    return %c0_i32, %c0_i32_0 : i32, i32
  }
  func.func @transform_5(%arg0: i32) -> (i32, i32) {
    %c0_i32 = arith.constant 0 : i32
    %c0_i32_0 = arith.constant 0 : i32
    %c0_i32_1 = arith.constant 0 : i32
    return %c0_i32, %c0_i32_0 : i32, i32
  }
  func.func @transform_6(%arg0: i32) -> (i32, i32, i32) {
    %c0_i32 = arith.constant 0 : i32
    %c0_i32_0 = arith.constant 0 : i32
    %c0_i32_1 = arith.constant 0 : i32
    return %arg0, %c0_i32, %c0_i32_0 : i32, i32, i32
  }
}

</mosaic_0001>

<llo_original>
// kernel: tpu_custom_call.1
$region0: #{tpu_custom_call.1}
  #allocation0 [shape = 'u32[]', space=smem, size = 0x4, offset = 0x4, fixed_abs, tag = 'smem constant byte address 0x4 - core index']
  #allocation1 [shape = 'u32[144,128]{1,0:T(1,128)}', space=vmem, size = 0x12000, scoped, tag = 'internal scratch']
  #allocation2 [shape = 'f32[20,128]{1,0:T(8,128)}', space=vmem, size = 0x3000, scoped, tag = 'scratch operand']
  %s0 = inlined_call_operand.vmem [shape: f32[2,20,128], index: 0, kind: input, shape index: {}]
  %s1 = inlined_call_operand.vmem [shape: f32[16,1], index: 1, kind: input, shape index: {}]
  %s2 = inlined_call_operand.hbm [shape: f32[384,128], index: 2, kind: input, shape index: {}]
  %s3 = inlined_call_operand.vmem [shape: f32[1,128], index: 3, kind: input, shape index: {}]
  %s4 = inlined_call_operand.hbm [shape: f32[384,128], index: 4, kind: input, shape index: {}]
  %s5 = inlined_call_operand.vmem [shape: f32[1,128], index: 5, kind: input, shape index: {}]
  %s6 = inlined_call_operand.hbm [shape: f32[2,16,128], index: 6, kind: output, shape index: {}]
  %s7 = sld [smem:[#allocation0]]
  $region65: #{tpu_custom_call.1} parent=0
    _
  %s9 = ssub.s32 1, %s7
  %s10 = scalar_select 0, %s9, %s7
  $region1: #{tpu_custom_call.1} parent=0
    #allocation3 [shape = 'u8[196608]{0}', space=vmem, size = 0x30000, scoped, tag = 'input window, operand 2, single buffered']
    #allocation4 [shape = 's32[2]{0}', space=sflag, size = 0x8, scoped, tag = 'scoped memory for tpu_custom_call.1']
    #allocation5 [shape = 's32[2]{0}', space=sflag, size = 0x8, scoped, tag = 'scoped memory for tpu_custom_call.1']
    #allocation6 [shape = 'u8[196608]{0}', space=vmem, size = 0x30000, scoped, tag = 'input window, operand 4, single buffered']
    #allocation7 [shape = 's32[1]{0}', space=sflag, size = 0x4, scoped, tag = 'scoped memory for tpu_custom_call.1']
    #allocation8 [shape = 'u8[16384]{0}', space=vmem, size = 0x4000, scoped, tag = 'output window, operand 0']
    %11 = vsyncpa [#allocation4], 0
    %12 = vsyncpa [#allocation7], 0
    %13 = vsyncpa [#allocation5], 0
    %s14 = scalar_lea.sflag [#allocation5], 1
    %15 = vsyncpa %s14, 0
    loop: start=0, step=1, limit=4
    $region2: #{tpu_custom_call.1} parent=1 // loop_pre_header
      _
    $region3: #{tpu_custom_call.1} parent=1 // loop_header
      %s17 = sphi 0, %s21
      %p18 = scmp.ge.s32.totalorder %s17, 4
      %s27 = sphi 0, %s29
      %s30 = sphi 0, %s27
      %s31 = sphi 0, %s30
      %s47 = sphi 0, %s31
      %s51 = sphi 0, %s51
      %s53 = sphi 0, %s51
      %s54 = sphi 0, %s53
      %s68 = sphi 0, %s54
      %s72 = sphi 0, %s72
      %s74 = sphi 0, %s72
      %s75 = sphi 0, %s74
      %s89 = sphi 0, %s75
      %s93 = sphi 0, %s93
      %s95 = sphi 0, %s93
      %s96 = sphi 0, %s95
      %s110 = sphi 0, %s96
      %s114 = sphi 0, %s114
      %s116 = sphi 0, %s114
      %s117 = sphi 0, %s116
      %s131 = sphi 0, %s117
      %s135 = sphi 0, %s135
      %s137 = sphi 0, %s135
      %s138 = sphi 0, %s137
      %s152 = sphi 0, %s138
      %s158 = sphi 0, %s160
      %s161 = sphi 0, %s158
      %s162 = sphi 0, %s161
      %s178 = sphi 0, %s162
    $region4: #{tpu_custom_call.1} parent=1 // loop_header_branch
      %20 = sbr.rel (%p18) target = $region8
    $region5: #{tpu_custom_call.1} parent=1 // loop_body
      %s22 = ssub.s32 %s17, 1
      %s23 = ssub.s32 %s17, 2
      %s24 = sadd.s32 %s17, 1
      %s25 = ssub.s32 %s17, %s24
      %p26 = scmp.eq.s32.totalorder %s25, 0
      %s28 = sadd.s32 %s27, 1
      %s29 = scalar_select %p26, %s27, %s28
      %p32 = pneg %p26
      %p33 = scmp.eq.s32.totalorder %s17, 1
      %p34 = por %p32, %p33
      %p35 = scmp.ne.s32.totalorder %s27, %s30
      %p36 = scmp.eq.s32.totalorder %s17, 0
      %p37 = por %p35, %p36
      %p38 = scmp.ne.s32.totalorder %s27, %s30
      %p39 = scmp.eq.s32.totalorder %s22, 1
      %p40 = por %p38, %p39
      %p41 = scmp.ne.s32.totalorder %s30, %s31
      %p42 = scmp.eq.s32.totalorder %s22, 0
      %p43 = por %p41, %p42
      %p44 = scmp.ne.s32.totalorder %s30, %s31
      %p45 = scmp.eq.s32.totalorder %s23, 1
      %p46 = por %p44, %p45
      %p48 = scmp.ne.s32.totalorder %s31, %s47
      %p49 = scmp.eq.s32.totalorder %s23, 0
      %p50 = por %p48, %p49
      %s52 = sadd.s32 %s51, 1
      %p55 = scmp.eq.s32.totalorder %s17, 1
      %p56 = scmp.ne.s32.totalorder %s51, %s53
      %p57 = scmp.eq.s32.totalorder %s17, 0
      %p58 = por %p56, %p57
      %p59 = scmp.ne.s32.totalorder %s51, %s53
      %p60 = scmp.eq.s32.totalorder %s22, 1
      %p61 = por %p59, %p60
      %p62 = scmp.ne.s32.totalorder %s53, %s54
      %p63 = scmp.eq.s32.totalorder %s22, 0
      %p64 = por %p62, %p63
      %p65 = scmp.ne.s32.totalorder %s53, %s54
      %p66 = scmp.eq.s32.totalorder %s23, 1
      %p67 = por %p65, %p66
      %p69 = scmp.ne.s32.totalorder %s54, %s68
      %p70 = scmp.eq.s32.totalorder %s23, 0
      %p71 = por %p69, %p70
      %s73 = sadd.s32 %s72, 1
      %p76 = scmp.eq.s32.totalorder %s17, 1
      %p77 = scmp.ne.s32.totalorder %s72, %s74
      %p78 = scmp.eq.s32.totalorder %s17, 0
      %p79 = por %p77, %p78
      %p80 = scmp.ne.s32.totalorder %s72, %s74
      %p81 = scmp.eq.s32.totalorder %s22, 1
      %p82 = por %p80, %p81
      %p83 = scmp.ne.s32.totalorder %s74, %s75
      %p84 = scmp.eq.s32.totalorder %s22, 0
      %p85 = por %p83, %p84
      %p86 = scmp.ne.s32.totalorder %s74, %s75
      %p87 = scmp.eq.s32.totalorder %s23, 1
      %p88 = por %p86, %p87
      %p90 = scmp.ne.s32.totalorder %s75, %s89
      %p91 = scmp.eq.s32.totalorder %s23, 0
      %p92 = por %p90, %p91
      %s94 = sadd.s32 %s93, 1
      %p97 = scmp.eq.s32.totalorder %s17, 1
      %p98 = scmp.ne.s32.totalorder %s93, %s95
      %p99 = scmp.eq.s32.totalorder %s17, 0
      %p100 = por %p98, %p99
      %p101 = scmp.ne.s32.totalorder %s93, %s95
      %p102 = scmp.eq.s32.totalorder %s22, 1
      %p103 = por %p101, %p102
      %p104 = scmp.ne.s32.totalorder %s95, %s96
      %p105 = scmp.eq.s32.totalorder %s22, 0
      %p106 = por %p104, %p105
      %p107 = scmp.ne.s32.totalorder %s95, %s96
      %p108 = scmp.eq.s32.totalorder %s23, 1
      %p109 = por %p107, %p108
      %p111 = scmp.ne.s32.totalorder %s96, %s110
      %p112 = scmp.eq.s32.totalorder %s23, 0
      %p113 = por %p111, %p112
      %s115 = sadd.s32 %s114, 1
      %p118 = scmp.eq.s32.totalorder %s17, 1
      %p119 = scmp.ne.s32.totalorder %s114, %s116
      %p120 = scmp.eq.s32.totalorder %s17, 0
      %p121 = por %p119, %p120
      %p122 = scmp.ne.s32.totalorder %s114, %s116
      %p123 = scmp.eq.s32.totalorder %s22, 1
      %p124 = por %p122, %p123
      %p125 = scmp.ne.s32.totalorder %s116, %s117
      %p126 = scmp.eq.s32.totalorder %s22, 0
      %p127 = por %p125, %p126
      %p128 = scmp.ne.s32.totalorder %s116, %s117
      %p129 = scmp.eq.s32.totalorder %s23, 1
      %p130 = por %p128, %p129
      %p132 = scmp.ne.s32.totalorder %s117, %s131
      %p133 = scmp.eq.s32.totalorder %s23, 0
      %p134 = por %p132, %p133
      %s136 = sadd.s32 %s135, 1
      %p139 = scmp.eq.s32.totalorder %s17, 1
      %p140 = scmp.ne.s32.totalorder %s135, %s137
      %p141 = scmp.eq.s32.totalorder %s17, 0
      %p142 = por %p140, %p141
      %p143 = scmp.ne.s32.totalorder %s135, %s137
      %p144 = scmp.eq.s32.totalorder %s22, 1
      %p145 = por %p143, %p144
      %p146 = scmp.ne.s32.totalorder %s137, %s138
      %p147 = scmp.eq.s32.totalorder %s22, 0
      %p148 = por %p146, %p147
      %p149 = scmp.ne.s32.totalorder %s137, %s138
      %p150 = scmp.eq.s32.totalorder %s23, 1
      %p151 = por %p149, %p150
      %p153 = scmp.ne.s32.totalorder %s138, %s152
      %p154 = scmp.eq.s32.totalorder %s23, 0
      %p155 = por %p153, %p154
      %s156 = ssub.s32 %s17, %s24
      %p157 = scmp.eq.s32.totalorder %s156, 0
      %s159 = sadd.s32 %s158, 1
      %s160 = scalar_select %p157, %s158, %s159
      %p163 = pneg %p157
      %p164 = scmp.eq.s32.totalorder %s17, 1
      %p165 = por %p163, %p164
      %p166 = scmp.ne.s32.totalorder %s158, %s161
      %p167 = scmp.eq.s32.totalorder %s17, 0
      %p168 = por %p166, %p167
      %p169 = scmp.ne.s32.totalorder %s158, %s161
      %p170 = scmp.eq.s32.totalorder %s22, 1
      %p171 = por %p169, %p170
      %p172 = scmp.ne.s32.totalorder %s161, %s162
      %p173 = scmp.eq.s32.totalorder %s22, 0
      %p174 = por %p172, %p173
      %p175 = scmp.ne.s32.totalorder %s161, %s162
      %p176 = scmp.eq.s32.totalorder %s23, 1
      %p177 = por %p175, %p176
      %p179 = scmp.ne.s32.totalorder %s162, %s178
      %p180 = scmp.eq.s32.totalorder %s23, 0
      %p181 = por %p179, %p180
      %p182 = scmp.le.s32.totalorder 1, %s17
      %p183 = scmp.lt.s32.totalorder %s17, 3
      %p184 = pnand %p182, %p183
      %p185 = pneg %p184
      // Predicated region
      $region9: #{tpu_custom_call.1} parent=5 // pred_check
        _
      $region10: #{tpu_custom_call.1} parent=5 // pred_check_branch
        %187 = sbr.rel (%p184) target = $region12
      $region11: #{tpu_custom_call.1} parent=5 // pred_region
        %s188 = ssub.s32 %s17, 1
        // Predicated region
        $region13: #{tpu_custom_call.1} parent=11 // pred_check
          %p189 = pneg %p64
        $region14: #{tpu_custom_call.1} parent=11 // pred_check_branch
          %191 = sbr.rel (%p189) target = $region16
        $region15: #{tpu_custom_call.1} parent=11 // pred_region
          _
        $region16: #{tpu_custom_call.1} parent=11 // pred_fallthru
          _
        // Predicated region
        $region17: #{tpu_custom_call.1} parent=11 // pred_check
          %p192 = pneg %p85
        $region18: #{tpu_custom_call.1} parent=11 // pred_check_branch
          %194 = sbr.rel (%p192) target = $region20
        $region19: #{tpu_custom_call.1} parent=11 // pred_region
          %s196 = ssub.s32 6144, 6144
          %197 = vsyncadd [#allocation4], %s196
          %s198 = sshll.u32 [#allocation3], 4
          %s199 = int_to_ptr.vmem [resolvable:$true] %s198
          %204 = dma.hbm_to_vmem [thread:$0]  %s2, 6144, %s199, [#allocation4], 128, 128, 8
        $region20: #{tpu_custom_call.1} parent=11 // pred_fallthru
          _
        // Predicated region
        $region21: #{tpu_custom_call.1} parent=11 // pred_check
          %p205 = pneg %p106
        $region22: #{tpu_custom_call.1} parent=11 // pred_check_branch
          %207 = sbr.rel (%p205) target = $region24
        $region23: #{tpu_custom_call.1} parent=11 // pred_region
          _
        $region24: #{tpu_custom_call.1} parent=11 // pred_fallthru
          _
        // Predicated region
        $region25: #{tpu_custom_call.1} parent=11 // pred_check
          %p208 = pneg %p127
        $region26: #{tpu_custom_call.1} parent=11 // pred_check_branch
          %210 = sbr.rel (%p208) target = $region28
        $region27: #{tpu_custom_call.1} parent=11 // pred_region
          %s212 = ssub.s32 6144, 6144
          %213 = vsyncadd [#allocation7], %s212
          %s214 = sshll.u32 [#allocation6], 4
          %s215 = int_to_ptr.vmem [resolvable:$true] %s214
          %220 = dma.hbm_to_vmem [thread:$0]  %s4, 6144, %s215, [#allocation7], 128, 128, 8
        $region28: #{tpu_custom_call.1} parent=11 // pred_fallthru
          _
        // Predicated region
        $region29: #{tpu_custom_call.1} parent=11 // pred_check
          %p221 = pneg %p148
        $region30: #{tpu_custom_call.1} parent=11 // pred_check_branch
          %223 = sbr.rel (%p221) target = $region32
        $region31: #{tpu_custom_call.1} parent=11 // pred_region
          _
        $region32: #{tpu_custom_call.1} parent=11 // pred_fallthru
          _
      $region12: #{tpu_custom_call.1} parent=5 // pred_fallthru
        _
      %p224 = scmp.lt.s32.totalorder %s17, 2
      // Predicated region
      $region33: #{tpu_custom_call.1} parent=5 // pred_check
        %p225 = pneg %p224
      $region34: #{tpu_custom_call.1} parent=5 // pred_check_branch
        %227 = sbr.rel (%p225) target = $region36
      $region35: #{tpu_custom_call.1} parent=5 // pred_region
        // Predicated region
        $region37: #{tpu_custom_call.1} parent=35 // pred_check
          %p228 = pneg %p37
        $region38: #{tpu_custom_call.1} parent=35 // pred_check_branch
          %230 = sbr.rel (%p228) target = $region40
        $region39: #{tpu_custom_call.1} parent=35 // pred_region
          %p231 = scmp.lt.s32.totalorder %s17, 1
          %s232 = scalar_select %p231, %s17, 1
          %s233 = smul.addr %s232, 3
          %s234 = smul.addr %s233, 8
          %s235 = scalar_lea.vmem %s0, %s234
        $region40: #{tpu_custom_call.1} parent=35 // pred_fallthru
          _
      $region36: #{tpu_custom_call.1} parent=5 // pred_fallthru
        _
      %p236 = scmp.le.s32.totalorder 1, %s17
      %p237 = scmp.lt.s32.totalorder %s17, 3
      %p238 = pnand %p236, %p237
      %p239 = pneg %p238
      // Predicated region
      $region41: #{tpu_custom_call.1} parent=5 // pred_check
        _
      $region42: #{tpu_custom_call.1} parent=5 // pred_check_branch
        %241 = sbr.rel (%p238) target = $region44
      $region43: #{tpu_custom_call.1} parent=5 // pred_region
        %s242 = ssub.s32 %s17, 1
        // Predicated region
        $region45: #{tpu_custom_call.1} parent=43 // pred_check
          %p243 = pneg %p85
        $region46: #{tpu_custom_call.1} parent=43 // pred_check_branch
          %245 = sbr.rel (%p243) target = $region48
        $region47: #{tpu_custom_call.1} parent=43 // pred_region
          %246 = dma.done [#allocation4], 6144
        $region48: #{tpu_custom_call.1} parent=43 // pred_fallthru
          _
        // Predicated region
        $region49: #{tpu_custom_call.1} parent=43 // pred_check
          %p247 = pneg %p127
        $region50: #{tpu_custom_call.1} parent=43 // pred_check_branch
          %249 = sbr.rel (%p247) target = $region52
        $region51: #{tpu_custom_call.1} parent=43 // pred_region
          %250 = dma.done [#allocation7], 6144
        $region52: #{tpu_custom_call.1} parent=43 // pred_fallthru
          _
        %p251 = scmp.lt.s32.totalorder %s22, 1
        %s252 = scalar_select %p251, %s22, 1
        %s253 = smul.addr %s252, 3
        %s254 = smul.addr %s253, 8
        %s255 = scalar_lea.vmem %s0, %s254
        %p256 = pneg %p43
        %p257 = pneg %p40
        %p258 = pneg %p64
        %p259 = pneg %p61
        %p260 = pneg %p85
        %p261 = pneg %p82
        %p262 = pneg %p106
        %p263 = pneg %p103
        %p264 = pneg %p127
        %p265 = pneg %p124
        %p266 = pneg %p148
        %p267 = pneg %p145
        %p268 = pneg %p174
        %p269 = pneg %p171
        %s270 = sand.u32 %s161, 1
        %s271 = scalar_lea.sflag [#allocation5], %s270
        %s272 = sand.u32 %s161, 1
        %s273 = smul.addr %s272, 16
        %s274 = scalar_lea.vmem [#allocation8], %s273
        %p275 = scmp.lt.s32.totalorder %s22, 1
        %s276 = scalar_select %p275, %s22, 1
        %s277 = smul.addr %s276, 3
        %s278 = smul.addr %s277, 8
        %s279 = scalar_lea.vmem %s0, %s278
        %v280 = vld [vmem:[%s279] sm:$0xff]
        %v281 = vld [vmem:[%s279 + $0x8] sm:$0xff]
        %v282 = vld [vmem:[%s279 + $0x2] sm:$0xff]
        %v283 = vld [vmem:[%s279 + $0xa] sm:$0xff]
        %v284 = vld [vmem:[%s279 + $0x4] sm:$0xff]
        %v285 = vld [vmem:[%s279 + $0xc] sm:$0xff]
        %v286 = vld [vmem:[#allocation3] sm:$0xff]
        %v287 = vld [vmem:[#allocation3 + $0x8] sm:$0xff]
        %v288 = vld [vmem:[#allocation3 + $0x10] sm:$0xff]
        %v289 = vld [vmem:[#allocation3 + $0x18] sm:$0xff]
        %v290 = vld [vmem:[#allocation3 + $0x20] sm:$0xff]
        %v291 = vld [vmem:[#allocation3 + $0x28] sm:$0xff]
        %v292 = vld [vmem:[#allocation3 + $0x30] sm:$0xff]
        %v293 = vld [vmem:[#allocation3 + $0x38] sm:$0xff]
        %v294 = vld [vmem:[#allocation3 + $0x40] sm:$0xff]
        %v295 = vld [vmem:[#allocation3 + $0x48] sm:$0xff]
        %v296 = vld [vmem:[#allocation3 + $0x50] sm:$0xff]
        %v297 = vld [vmem:[#allocation3 + $0x58] sm:$0xff]
        %v298 = vld [vmem:[#allocation3 + $0x60] sm:$0xff]
        %v299 = vld [vmem:[#allocation3 + $0x68] sm:$0xff]
        %v300 = vld [vmem:[#allocation3 + $0x70] sm:$0xff]
        %v301 = vld [vmem:[#allocation3 + $0x78] sm:$0xff]
        %v302 = vld [vmem:[#allocation3 + $0x80] sm:$0xff]
        %v303 = vld [vmem:[#allocation3 + $0x88] sm:$0xff]
        %v304 = vld [vmem:[#allocation3 + $0x90] sm:$0xff]
        %v305 = vld [vmem:[#allocation3 + $0x98] sm:$0xff]
        %v306 = vld [vmem:[#allocation3 + $0xa0] sm:$0xff]
        %v307 = vld [vmem:[#allocation3 + $0xa8] sm:$0xff]
        %v308 = vld [vmem:[#allocation3 + $0xb0] sm:$0xff]
        %v309 = vld [vmem:[#allocation3 + $0xb8] sm:$0xff]
        %v310 = vld [vmem:[#allocation3 + $0xc0] sm:$0xff]
        %v311 = vld [vmem:[#allocation3 + $0xc8] sm:$0xff]
        %v312 = vld [vmem:[#allocation3 + $0xd0] sm:$0xff]
        %v313 = vld [vmem:[#allocation3 + $0xd8] sm:$0xff]
        %v314 = vld [vmem:[#allocation3 + $0xe0] sm:$0xff]
        %v315 = vld [vmem:[#allocation3 + $0xe8] sm:$0xff]
        %v316 = vld [vmem:[#allocation3 + $0xf0] sm:$0xff]
        %v317 = vld [vmem:[#allocation3 + $0xf8] sm:$0xff]
        %v318 = vld [vmem:[#allocation3 + $0x100] sm:$0xff]
        %v319 = vld [vmem:[#allocation3 + $0x108] sm:$0xff]
        %v320 = vld [vmem:[#allocation3 + $0x110] sm:$0xff]
        %v321 = vld [vmem:[#allocation3 + $0x118] sm:$0xff]
        %v322 = vld [vmem:[#allocation3 + $0x120] sm:$0xff]
        %v323 = vld [vmem:[#allocation3 + $0x128] sm:$0xff]
        %v324 = vld [vmem:[#allocation3 + $0x130] sm:$0xff]
        %v325 = vld [vmem:[#allocation3 + $0x138] sm:$0xff]
        %v326 = vld [vmem:[#allocation3 + $0x140] sm:$0xff]
        %v327 = vld [vmem:[#allocation3 + $0x148] sm:$0xff]
        %v328 = vld [vmem:[#allocation3 + $0x150] sm:$0xff]
        %v329 = vld [vmem:[#allocation3 + $0x158] sm:$0xff]
        %v330 = vld [vmem:[#allocation3 + $0x160] sm:$0xff]
        %v331 = vld [vmem:[#allocation3 + $0x168] sm:$0xff]
        %v332 = vld [vmem:[#allocation3 + $0x170] sm:$0xff]
        %v333 = vld [vmem:[#allocation3 + $0x178] sm:$0xff]
        %v334 = vld [vmem:[%s3] sm:$0x1]
        %v336 = vlaneseq
        %v337 = vshrl.u32 %v336, 7
        %v338 = vsub.s32 0, %v337
        %v339 = vrot.slane %v334, %v338
        %341 = vmatprep.subr.mxu0 0.0
        %342 = vmatpush1.msra.mxu0 %v286
        %343 = vmatprep.subr.mxu0 0.0
        %344 = vmatpush1.msra.mxu0 %v287
        %345 = vmatprep.subr.mxu0 0.0
        %346 = vmatpush1.msra.mxu0 %v288
        %347 = vmatprep.subr.mxu0 0.0
        %348 = vmatpush1.msra.mxu0 %v289
        %349 = vmatprep.subr.mxu0 0.0
        %350 = vmatpush1.msra.mxu0 %v290
        %351 = vmatprep.subr.mxu0 0.0
        %352 = vmatpush1.msra.mxu0 %v291
        %353 = vmatprep.subr.mxu0 0.0
        %354 = vmatpush1.msra.mxu0 %v292
        %355 = vmatprep.subr.mxu0 0.0
        %356 = vmatpush1.msra.mxu0 %v293
        %357 = vmatprep.subr.mxu0 0.0
        %358 = vmatpush1.msra.mxu0 %v294
        %359 = vmatprep.subr.mxu0 0.0
        %360 = vmatpush1.msra.mxu0 %v295
        %361 = vmatprep.subr.mxu0 0.0
        %362 = vmatpush1.msra.mxu0 %v296
        %363 = vmatprep.subr.mxu0 0.0
        %364 = vmatpush1.msra.mxu0 %v297
        %365 = vmatprep.subr.mxu0 0.0
        %366 = vmatpush1.msra.mxu0 %v298
        %367 = vmatprep.subr.mxu0 0.0
        %368 = vmatpush1.msra.mxu0 %v299
        %369 = vmatprep.subr.mxu0 0.0
        %370 = vmatpush1.msra.mxu0 %v300
        %371 = vmatprep.subr.mxu0 0.0
        %372 = vmatpush1.msra.mxu0 %v301
        %373 = vmatprep.subr.mxu0 0.0
        %374 = vmatpush1.msra.mxu0 %v302
        %375 = vmatprep.subr.mxu0 0.0
        %376 = vmatpush1.msra.mxu0 %v303
        %377 = vmatprep.subr.mxu0 0.0
        %378 = vmatpush1.msra.mxu0 %v304
        %379 = vmatprep.subr.mxu0 0.0
        %380 = vmatpush1.msra.mxu0 %v305
        %381 = vmatprep.subr.mxu0 0.0
        %382 = vmatpush1.msra.mxu0 %v306
        %383 = vmatprep.subr.mxu0 0.0
        %384 = vmatpush1.msra.mxu0 %v307
        %385 = vmatprep.subr.mxu0 0.0
        %386 = vmatpush1.msra.mxu0 %v308
        %387 = vmatprep.subr.mxu0 0.0
        %388 = vmatpush1.msra.mxu0 %v309
        %389 = vmatprep.subr.mxu0 0.0
        %390 = vmatpush1.msra.mxu0 %v310
        %391 = vmatprep.subr.mxu0 0.0
        %392 = vmatpush1.msra.mxu0 %v311
        %393 = vmatprep.subr.mxu0 0.0
        %394 = vmatpush1.msra.mxu0 %v312
        %395 = vmatprep.subr.mxu0 0.0
        %396 = vmatpush1.msra.mxu0 %v313
        %397 = vmatprep.subr.mxu0 0.0
        %398 = vmatpush1.msra.mxu0 %v314
        %399 = vmatprep.subr.mxu0 0.0
        %400 = vmatpush1.msra.mxu0 %v315
        %401 = vmatprep.subr.mxu0 0.0
        %402 = vmatpush1.msra.mxu0 %v316
        %403 = vmatprep.subr.mxu0 0.0
        %404 = vmatpush1.msra.mxu0 %v317
        %405 = vmatprep.mubr.f32.mxu0 %v282
        %406 = vmatmul.mubr.f32.gmra.mrb[0].mxu0 %v280
        %v407 = vpop.f32.mrb[0].mxu0
        %v408 = vadd.f32 %v339, %v407
        %v409 = vpop.f32.mrb[0].mxu0
        %410 = vmatprep.mubr.f32.mxu0 %v283
        %411 = vmatmul.mubr.f32.gmra.mrb[0].mxu0 %v281
        %v412 = vpop.f32.mrb[0].mxu0
        %v413 = vadd.f32 %v339, %v412
        %v414 = vpop.f32.mrb[0].mxu0
        %415 = vdwg.mxu0
        %416 = vmatprep.subr.mxu0 0.0
        %417 = vmatpush1.msra.mxu0 %v318
        %418 = vmatprep.subr.mxu0 0.0
        %419 = vmatpush1.msra.mxu0 %v319
        %420 = vmatprep.subr.mxu0 0.0
        %421 = vmatpush1.msra.mxu0 %v320
        %422 = vmatprep.subr.mxu0 0.0
        %423 = vmatpush1.msra.mxu0 %v321
        %424 = vmatprep.subr.mxu0 0.0
        %425 = vmatpush1.msra.mxu0 %v322
        %426 = vmatprep.subr.mxu0 0.0
        %427 = vmatpush1.msra.mxu0 %v323
        %428 = vmatprep.subr.mxu0 0.0
        %429 = vmatpush1.msra.mxu0 %v324
        %430 = vmatprep.subr.mxu0 0.0
        %431 = vmatpush1.msra.mxu0 %v325
        %432 = vmatprep.subr.mxu0 0.0
        %433 = vmatpush1.msra.mxu0 %v326
        %434 = vmatprep.subr.mxu0 0.0
        %435 = vmatpush1.msra.mxu0 %v327
        %436 = vmatprep.subr.mxu0 0.0
        %437 = vmatpush1.msra.mxu0 %v328
        %438 = vmatprep.subr.mxu0 0.0
        %439 = vmatpush1.msra.mxu0 %v329
        %440 = vmatprep.subr.mxu0 0.0
        %441 = vmatpush1.msra.mxu0 %v330
        %442 = vmatprep.subr.mxu0 0.0
        %443 = vmatpush1.msra.mxu0 %v331
        %444 = vmatprep.subr.mxu0 0.0
        %445 = vmatpush1.msra.mxu0 %v332
        %446 = vmatprep.subr.mxu0 0.0
        %447 = vmatpush1.msra.mxu0 %v333
        %448 = vmatprep.subr.mxu0 0.0
        %449 = vmatpush1.msra.mxu0 0.0
        %450 = vmatprep.subr.mxu0 0.0
        %451 = vmatpush1.msra.mxu0 0.0
        %452 = vmatprep.subr.mxu0 0.0
        %453 = vmatpush1.msra.mxu0 0.0
        %454 = vmatprep.subr.mxu0 0.0
        %455 = vmatpush1.msra.mxu0 0.0
        %456 = vmatprep.subr.mxu0 0.0
        %457 = vmatpush1.msra.mxu0 0.0
        %458 = vmatprep.subr.mxu0 0.0
        %459 = vmatpush1.msra.mxu0 0.0
        %460 = vmatprep.subr.mxu0 0.0
        %461 = vmatpush1.msra.mxu0 0.0
        %462 = vmatprep.subr.mxu0 0.0
        %463 = vmatpush1.msra.mxu0 0.0
        %464 = vmatprep.subr.mxu0 0.0
        %465 = vmatpush1.msra.mxu0 0.0
        %466 = vmatprep.subr.mxu0 0.0
        %467 = vmatpush1.msra.mxu0 0.0
        %468 = vmatprep.subr.mxu0 0.0
        %469 = vmatpush1.msra.mxu0 0.0
        %470 = vmatprep.subr.mxu0 0.0
        %471 = vmatpush1.msra.mxu0 0.0
        %472 = vmatprep.subr.mxu0 0.0
        %473 = vmatpush1.msra.mxu0 0.0
        %474 = vmatprep.subr.mxu0 0.0
        %475 = vmatpush1.msra.mxu0 0.0
        %476 = vmatprep.subr.mxu0 0.0
        %477 = vmatpush1.msra.mxu0 0.0
        %478 = vmatprep.subr.mxu0 0.0
        %479 = vmatpush1.msra.mxu0 0.0
        %480 = vmatprep.mubr.f32.mxu0 0.0
        %481 = vmatmul.mubr.f32.gmra.mrb[0].mxu0 %v284
        %v482 = vpop.f32.mrb[0].mxu0
        %v483 = vadd.f32 %v408, %v482
        %v484 = vpop.f32.mrb[0].mxu0
        %485 = vmatprep.mubr.f32.mxu0 0.0
        %486 = vmatmul.mubr.f32.gmra.mrb[0].mxu0 %v285
        %v487 = vpop.f32.mrb[0].mxu0
        %v488 = vadd.f32 %v413, %v487
        %v489 = vpop.f32.mrb[0].mxu0
        %490 = vdwg.mxu0
        %v491 = vmax.f32 %v483, 0.0
        %v492 = vmax.f32 %v488, 0.0
        %493 = vst [vmem:[#allocation2] sm:$0x3] 0.0
        %494 = vst [vmem:[#allocation2 + $0x12] sm:$0x3] 0.0
        %495 = vst [vmem:[#allocation2 + $0x2] sm:$0xff] %v491
        %496 = vst [vmem:[#allocation2 + $0xa] sm:$0xff] %v492
        %v497 = vld [vmem:[#allocation2] sm:$0xff]
        %v498 = vld [vmem:[#allocation2 + $0x8] sm:$0xff]
        %v499 = vld [vmem:[#allocation2 + $0x2] sm:$0xff]
        %v500 = vld [vmem:[#allocation2 + $0xa] sm:$0xff]
        %v501 = vld [vmem:[#allocation2 + $0x4] sm:$0xff]
        %v502 = vld [vmem:[#allocation2 + $0xc] sm:$0xff]
        %v503 = vld [vmem:[#allocation6] sm:$0xff]
        %v504 = vld [vmem:[#allocation6 + $0x8] sm:$0xff]
        %v505 = vld [vmem:[#allocation6 + $0x10] sm:$0xff]
        %v506 = vld [vmem:[#allocation6 + $0x18] sm:$0xff]
        %v507 = vld [vmem:[#allocation6 + $0x20] sm:$0xff]
        %v508 = vld [vmem:[#allocation6 + $0x28] sm:$0xff]
        %v509 = vld [vmem:[#allocation6 + $0x30] sm:$0xff]
        %v510 = vld [vmem:[#allocation6 + $0x38] sm:$0xff]
        %v511 = vld [vmem:[#allocation6 + $0x40] sm:$0xff]
        %v512 = vld [vmem:[#allocation6 + $0x48] sm:$0xff]
        %v513 = vld [vmem:[#allocation6 + $0x50] sm:$0xff]
        %v514 = vld [vmem:[#allocation6 + $0x58] sm:$0xff]
        %v515 = vld [vmem:[#allocation6 + $0x60] sm:$0xff]
        %v516 = vld [vmem:[#allocation6 + $0x68] sm:$0xff]
        %v517 = vld [vmem:[#allocation6 + $0x70] sm:$0xff]
        %v518 = vld [vmem:[#allocation6 + $0x78] sm:$0xff]
        %v519 = vld [vmem:[#allocation6 + $0x80] sm:$0xff]
        %v520 = vld [vmem:[#allocation6 + $0x88] sm:$0xff]
        %v521 = vld [vmem:[#allocation6 + $0x90] sm:$0xff]
        %v522 = vld [vmem:[#allocation6 + $0x98] sm:$0xff]
        %v523 = vld [vmem:[#allocation6 + $0xa0] sm:$0xff]
        %v524 = vld [vmem:[#allocation6 + $0xa8] sm:$0xff]
        %v525 = vld [vmem:[#allocation6 + $0xb0] sm:$0xff]
        %v526 = vld [vmem:[#allocation6 + $0xb8] sm:$0xff]
        %v527 = vld [vmem:[#allocation6 + $0xc0] sm:$0xff]
        %v528 = vld [vmem:[#allocation6 + $0xc8] sm:$0xff]
        %v529 = vld [vmem:[#allocation6 + $0xd0] sm:$0xff]
        %v530 = vld [vmem:[#allocation6 + $0xd8] sm:$0xff]
        %v531 = vld [vmem:[#allocation6 + $0xe0] sm:$0xff]
        %v532 = vld [vmem:[#allocation6 + $0xe8] sm:$0xff]
        %v533 = vld [vmem:[#allocation6 + $0xf0] sm:$0xff]
        %v534 = vld [vmem:[#allocation6 + $0xf8] sm:$0xff]
        %v535 = vld [vmem:[#allocation6 + $0x100] sm:$0xff]
        %v536 = vld [vmem:[#allocation6 + $0x108] sm:$0xff]
        %v537 = vld [vmem:[#allocation6 + $0x110] sm:$0xff]
        %v538 = vld [vmem:[#allocation6 + $0x118] sm:$0xff]
        %v539 = vld [vmem:[#allocation6 + $0x120] sm:$0xff]
        %v540 = vld [vmem:[#allocation6 + $0x128] sm:$0xff]
        %v541 = vld [vmem:[#allocation6 + $0x130] sm:$0xff]
        %v542 = vld [vmem:[#allocation6 + $0x138] sm:$0xff]
        %v543 = vld [vmem:[#allocation6 + $0x140] sm:$0xff]
        %v544 = vld [vmem:[#allocation6 + $0x148] sm:$0xff]
        %v545 = vld [vmem:[#allocation6 + $0x150] sm:$0xff]
        %v546 = vld [vmem:[#allocation6 + $0x158] sm:$0xff]
        %v547 = vld [vmem:[#allocation6 + $0x160] sm:$0xff]
        %v548 = vld [vmem:[#allocation6 + $0x168] sm:$0xff]
        %v549 = vld [vmem:[#allocation6 + $0x170] sm:$0xff]
        %v550 = vld [vmem:[#allocation6 + $0x178] sm:$0xff]
        %v551 = vld [vmem:[%s5] sm:$0x1]
        %v553 = vlaneseq
        %v554 = vshrl.u32 %v553, 7
        %v555 = vsub.s32 0, %v554
        %v556 = vrot.slane %v551, %v555
        %558 = vmatprep.subr.mxu0 0.0
        %559 = vmatpush1.msra.mxu0 %v503
        %560 = vmatprep.subr.mxu0 0.0
        %561 = vmatpush1.msra.mxu0 %v504
        %562 = vmatprep.subr.mxu0 0.0
        %563 = vmatpush1.msra.mxu0 %v505
        %564 = vmatprep.subr.mxu0 0.0
        %565 = vmatpush1.msra.mxu0 %v506
        %566 = vmatprep.subr.mxu0 0.0
        %567 = vmatpush1.msra.mxu0 %v507
        %568 = vmatprep.subr.mxu0 0.0
        %569 = vmatpush1.msra.mxu0 %v508
        %570 = vmatprep.subr.mxu0 0.0
        %571 = vmatpush1.msra.mxu0 %v509
        %572 = vmatprep.subr.mxu0 0.0
        %573 = vmatpush1.msra.mxu0 %v510
        %574 = vmatprep.subr.mxu0 0.0
        %575 = vmatpush1.msra.mxu0 %v511
        %576 = vmatprep.subr.mxu0 0.0
        %577 = vmatpush1.msra.mxu0 %v512
        %578 = vmatprep.subr.mxu0 0.0
        %579 = vmatpush1.msra.mxu0 %v513
        %580 = vmatprep.subr.mxu0 0.0
        %581 = vmatpush1.msra.mxu0 %v514
        %582 = vmatprep.subr.mxu0 0.0
        %583 = vmatpush1.msra.mxu0 %v515
        %584 = vmatprep.subr.mxu0 0.0
        %585 = vmatpush1.msra.mxu0 %v516
        %586 = vmatprep.subr.mxu0 0.0
        %587 = vmatpush1.msra.mxu0 %v517
        %588 = vmatprep.subr.mxu0 0.0
        %589 = vmatpush1.msra.mxu0 %v518
        %590 = vmatprep.subr.mxu0 0.0
        %591 = vmatpush1.msra.mxu0 %v519
        %592 = vmatprep.subr.mxu0 0.0
        %593 = vmatpush1.msra.mxu0 %v520
        %594 = vmatprep.subr.mxu0 0.0
        %595 = vmatpush1.msra.mxu0 %v521
        %596 = vmatprep.subr.mxu0 0.0
        %597 = vmatpush1.msra.mxu0 %v522
        %598 = vmatprep.subr.mxu0 0.0
        %599 = vmatpush1.msra.mxu0 %v523
        %600 = vmatprep.subr.mxu0 0.0
        %601 = vmatpush1.msra.mxu0 %v524
        %602 = vmatprep.subr.mxu0 0.0
        %603 = vmatpush1.msra.mxu0 %v525
        %604 = vmatprep.subr.mxu0 0.0
        %605 = vmatpush1.msra.mxu0 %v526
        %606 = vmatprep.subr.mxu0 0.0
        %607 = vmatpush1.msra.mxu0 %v527
        %608 = vmatprep.subr.mxu0 0.0
        %609 = vmatpush1.msra.mxu0 %v528
        %610 = vmatprep.subr.mxu0 0.0
        %611 = vmatpush1.msra.mxu0 %v529
        %612 = vmatprep.subr.mxu0 0.0
        %613 = vmatpush1.msra.mxu0 %v530
        %614 = vmatprep.subr.mxu0 0.0
        %615 = vmatpush1.msra.mxu0 %v531
        %616 = vmatprep.subr.mxu0 0.0
        %617 = vmatpush1.msra.mxu0 %v532
        %618 = vmatprep.subr.mxu0 0.0
        %619 = vmatpush1.msra.mxu0 %v533
        %620 = vmatprep.subr.mxu0 0.0
        %621 = vmatpush1.msra.mxu0 %v534
        %622 = vmatprep.mubr.f32.mxu0 %v499
        %623 = vmatmul.mubr.f32.gmra.mrb[0].mxu0 %v497
        %v624 = vpop.f32.mrb[0].mxu0
        %v625 = vadd.f32 %v556, %v624
        %v626 = vpop.f32.mrb[0].mxu0
        %627 = vmatprep.mubr.f32.mxu0 %v500
        %628 = vmatmul.mubr.f32.gmra.mrb[0].mxu0 %v498
        %v629 = vpop.f32.mrb[0].mxu0
        %v630 = vadd.f32 %v556, %v629
        %v631 = vpop.f32.mrb[0].mxu0
        %632 = vdwg.mxu0
        %633 = vmatprep.subr.mxu0 0.0
        %634 = vmatpush1.msra.mxu0 %v535
        %635 = vmatprep.subr.mxu0 0.0
        %636 = vmatpush1.msra.mxu0 %v536
        %637 = vmatprep.subr.mxu0 0.0
        %638 = vmatpush1.msra.mxu0 %v537
        %639 = vmatprep.subr.mxu0 0.0
        %640 = vmatpush1.msra.mxu0 %v538
        %641 = vmatprep.subr.mxu0 0.0
        %642 = vmatpush1.msra.mxu0 %v539
        %643 = vmatprep.subr.mxu0 0.0
        %644 = vmatpush1.msra.mxu0 %v540
        %645 = vmatprep.subr.mxu0 0.0
        %646 = vmatpush1.msra.mxu0 %v541
        %647 = vmatprep.subr.mxu0 0.0
        %648 = vmatpush1.msra.mxu0 %v542
        %649 = vmatprep.subr.mxu0 0.0
        %650 = vmatpush1.msra.mxu0 %v543
        %651 = vmatprep.subr.mxu0 0.0
        %652 = vmatpush1.msra.mxu0 %v544
        %653 = vmatprep.subr.mxu0 0.0
        %654 = vmatpush1.msra.mxu0 %v545
        %655 = vmatprep.subr.mxu0 0.0
        %656 = vmatpush1.msra.mxu0 %v546
        %657 = vmatprep.subr.mxu0 0.0
        %658 = vmatpush1.msra.mxu0 %v547
        %659 = vmatprep.subr.mxu0 0.0
        %660 = vmatpush1.msra.mxu0 %v548
        %661 = vmatprep.subr.mxu0 0.0
        %662 = vmatpush1.msra.mxu0 %v549
        %663 = vmatprep.subr.mxu0 0.0
        %664 = vmatpush1.msra.mxu0 %v550
        %665 = vmatprep.subr.mxu0 0.0
        %666 = vmatpush1.msra.mxu0 0.0
        %667 = vmatprep.subr.mxu0 0.0
        %668 = vmatpush1.msra.mxu0 0.0
        %669 = vmatprep.subr.mxu0 0.0
        %670 = vmatpush1.msra.mxu0 0.0
        %671 = vmatprep.subr.mxu0 0.0
        %672 = vmatpush1.msra.mxu0 0.0
        %673 = vmatprep.subr.mxu0 0.0
        %674 = vmatpush1.msra.mxu0 0.0
        %675 = vmatprep.subr.mxu0 0.0
        %676 = vmatpush1.msra.mxu0 0.0
        %677 = vmatprep.subr.mxu0 0.0
        %678 = vmatpush1.msra.mxu0 0.0
        %679 = vmatprep.subr.mxu0 0.0
        %680 = vmatpush1.msra.mxu0 0.0
        %681 = vmatprep.subr.mxu0 0.0
        %682 = vmatpush1.msra.mxu0 0.0
        %683 = vmatprep.subr.mxu0 0.0
        %684 = vmatpush1.msra.mxu0 0.0
        %685 = vmatprep.subr.mxu0 0.0
        %686 = vmatpush1.msra.mxu0 0.0
        %687 = vmatprep.subr.mxu0 0.0
        %688 = vmatpush1.msra.mxu0 0.0
        %689 = vmatprep.subr.mxu0 0.0
        %690 = vmatpush1.msra.mxu0 0.0
        %691 = vmatprep.subr.mxu0 0.0
        %692 = vmatpush1.msra.mxu0 0.0
        %693 = vmatprep.subr.mxu0 0.0
        %694 = vmatpush1.msra.mxu0 0.0
        %695 = vmatprep.subr.mxu0 0.0
        %696 = vmatpush1.msra.mxu0 0.0
        %697 = vmatprep.mubr.f32.mxu0 0.0
        %698 = vmatmul.mubr.f32.gmra.mrb[0].mxu0 %v501
        %v699 = vpop.f32.mrb[0].mxu0
        %v700 = vadd.f32 %v625, %v699
        %v701 = vpop.f32.mrb[0].mxu0
        %702 = vmatprep.mubr.f32.mxu0 0.0
        %703 = vmatmul.mubr.f32.gmra.mrb[0].mxu0 %v502
        %v704 = vpop.f32.mrb[0].mxu0
        %v705 = vadd.f32 %v630, %v704
        %v706 = vpop.f32.mrb[0].mxu0
        %707 = vdwg.mxu0
        %v708 = vld [vmem:[%s279 + $0x2] sm:$0xff]
        %v709 = vld [vmem:[%s279 + $0xa] sm:$0xff]
        %v710 = vadd.f32 %v700, %v708
        %v711 = vadd.f32 %v705, %v709
        %v712 = vmax.f32 %v710, 0.0
        %v713 = vmax.f32 %v711, 0.0
        %714 = vst [vmem:[%s274] sm:$0xff] %v712
        %715 = vst [vmem:[%s274 + $0x8] sm:$0xff] %v713
        %s716 = sand.u32 %s161, 1
        %s717 = scalar_lea.sflag [#allocation5], %s716
        %s718 = sand.u32 %s161, 1
        %s719 = smul.addr %s718, 16
        %s720 = scalar_lea.vmem [#allocation8], %s719
        // Predicated region
        $region53: #{tpu_custom_call.1} parent=43 // pred_check
          %p721 = pneg %p171
        $region54: #{tpu_custom_call.1} parent=43 // pred_check_branch
          %723 = sbr.rel (%p721) target = $region56
        $region55: #{tpu_custom_call.1} parent=43 // pred_region
          %s725 = ssub.s32 256, 256
          %726 = vsyncadd %s717, %s725
          %s727 = smul.addr %s22, 2
          %s728 = smul.addr %s727, 128
          %s729 = scalar_lea.hbm %s6, %s728
          %s730 = sshll.u32 %s720, 4
          %s731 = int_to_ptr.vmem [resolvable:$true] %s730
          %736 = dma.vmem_to_hbm [thread:$0]  %s731, 256, %s729, %s717, 128, 128, 8
        $region56: #{tpu_custom_call.1} parent=43 // pred_fallthru
          _
      $region44: #{tpu_custom_call.1} parent=5 // pred_fallthru
        _
      %p737 = scmp.le.s32.totalorder 2, %s17
      // Predicated region
      $region57: #{tpu_custom_call.1} parent=5 // pred_check
        %p738 = pneg %p737
      $region58: #{tpu_custom_call.1} parent=5 // pred_check_branch
        %740 = sbr.rel (%p738) target = $region60
      $region59: #{tpu_custom_call.1} parent=5 // pred_region
        %s741 = ssub.s32 %s17, 2
        // Predicated region
        $region61: #{tpu_custom_call.1} parent=59 // pred_check
          %p742 = pneg %p177
        $region62: #{tpu_custom_call.1} parent=59 // pred_check_branch
          %744 = sbr.rel (%p742) target = $region64
        $region63: #{tpu_custom_call.1} parent=59 // pred_region
          %s745 = sand.u32 %s162, 1
          %s746 = scalar_lea.sflag [#allocation5], %s745
          %s747 = sand.u32 %s162, 1
          %s748 = smul.addr %s747, 16
          %s749 = scalar_lea.vmem [#allocation8], %s748
          %750 = dma.done %s746, 256
        $region64: #{tpu_custom_call.1} parent=59 // pred_fallthru
          _
      $region60: #{tpu_custom_call.1} parent=5 // pred_fallthru
        _
    $region6: #{tpu_custom_call.1} parent=1 // loop_footer
      %s21 = sadd.s32 1, %s17
    $region7: #{tpu_custom_call.1} parent=1 // loop_footer_branch
      %16 = sbr.rel target = $region3
    $region8: #{tpu_custom_call.1} parent=1 // loop_exit
      _
    %751 = vsyncpa [#allocation4], 1
    %s752 = scalar_lea.sflag [#allocation4], 1
    %753 = vsyncpa %s752, 1
    %754 = vsyncpa [#allocation7], 1
    %755 = vsyncpa [#allocation5], 1
    %s756 = scalar_lea.sflag [#allocation5], 1
    %757 = vsyncpa %s756, 1

// kernel: tpu_custom_call.1
$region0: #{tpu_custom_call.1}
  #allocation0 [shape = 'u32[]', space=smem, size = 0x4, offset = 0x4, fixed_abs, tag = 'smem constant byte address 0x4 - core index']
  #allocation1 [shape = 'u32[144,128]{1,0:T(1,128)}', space=vmem, size = 0x12000, scoped, tag = 'internal scratch']
  #allocation2 [shape = 'f32[20,128]{1,0:T(8,128)}', space=vmem, size = 0x3000, scoped, tag = 'scratch operand']
  %s0 = inlined_call_operand.vmem [shape: f32[2,20,128], index: 0, kind: input, shape index: {}]
  %s1 = inlined_call_operand.vmem [shape: f32[16,1], index: 1, kind: input, shape index: {}]
  %s2 = inlined_call_operand.hbm [shape: f32[384,128], index: 2, kind: input, shape index: {}]
  %s3 = inlined_call_operand.vmem [shape: f32[1,128], index: 3, kind: input, shape index: {}]
  %s4 = inlined_call_operand.hbm [shape: f32[384,128], index: 4, kind: input, shape index: {}]
  %s5 = inlined_call_operand.vmem [shape: f32[1,128], index: 5, kind: input, shape index: {}]
  %s6 = inlined_call_operand.hbm [shape: f32[2,16,128], index: 6, kind: output, shape index: {}]
  %s7 = sld [smem:[#allocation0]]
  $region65: #{tpu_custom_call.1} parent=0
    _
  %s9 = ssub.s32 1, %s7
  %s10 = scalar_select 0, %s9, %s7
  $region1: #{tpu_custom_call.1} parent=0
    #allocation3 [shape = 'u8[196608]{0}', space=vmem, size = 0x30000, scoped, tag = 'input window, operand 2, single buffered']
    #allocation4 [shape = 's32[2]{0}', space=sflag, size = 0x8, scoped, tag = 'scoped memory for tpu_custom_call.1']
    #allocation5 [shape = 's32[2]{0}', space=sflag, size = 0x8, scoped, tag = 'scoped memory for tpu_custom_call.1']
    #allocation6 [shape = 'u8[196608]{0}', space=vmem, size = 0x30000, scoped, tag = 'input window, operand 4, single buffered']
    #allocation7 [shape = 's32[1]{0}', space=sflag, size = 0x4, scoped, tag = 'scoped memory for tpu_custom_call.1']
    #allocation8 [shape = 'u8[16384]{0}', space=vmem, size = 0x4000, scoped, tag = 'output window, operand 0']
    %11 = vsyncpa [#allocation4], 0
    %12 = vsyncpa [#allocation7], 0
    %13 = vsyncpa [#allocation5], 0
    %s14 = scalar_lea.sflag [#allocation5], 1
    %15 = vsyncpa %s14, 0
    loop: start=0, step=1, limit=4
    $region2: #{tpu_custom_call.1} parent=1 // loop_pre_header
      _
    $region3: #{tpu_custom_call.1} parent=1 // loop_header
      %s17 = sphi 0, %s21
      %p18 = scmp.ge.s32.totalorder %s17, 4
      %s27 = sphi 0, %s29
      %s30 = sphi 0, %s27
      %s31 = sphi 0, %s30
      %s47 = sphi 0, %s31
      %s51 = sphi 0, %s51
      %s53 = sphi 0, %s51
      %s54 = sphi 0, %s53
      %s68 = sphi 0, %s54
      %s72 = sphi 0, %s72
      %s74 = sphi 0, %s72
      %s75 = sphi 0, %s74
      %s89 = sphi 0, %s75
      %s93 = sphi 0, %s93
      %s95 = sphi 0, %s93
      %s96 = sphi 0, %s95
      %s110 = sphi 0, %s96
      %s114 = sphi 0, %s114
      %s116 = sphi 0, %s114
      %s117 = sphi 0, %s116
      %s131 = sphi 0, %s117
      %s135 = sphi 0, %s135
      %s137 = sphi 0, %s135
      %s138 = sphi 0, %s137
      %s152 = sphi 0, %s138
      %s158 = sphi 0, %s160
      %s161 = sphi 0, %s158
      %s162 = sphi 0, %s161
      %s178 = sphi 0, %s162
    $region4: #{tpu_custom_call.1} parent=1 // loop_header_branch
      %20 = sbr.rel (%p18) target = $region8
    $region5: #{tpu_custom_call.1} parent=1 // loop_body
      %s22 = ssub.s32 %s17, 1
      %s23 = ssub.s32 %s17, 2
      %s24 = sadd.s32 %s17, 1
      %s25 = ssub.s32 %s17, %s24
      %p26 = scmp.eq.s32.totalorder %s25, 0
      %s28 = sadd.s32 %s27, 1
      %s29 = scalar_select %p26, %s27, %s28
      %p32 = pneg %p26
      %p33 = scmp.eq.s32.totalorder %s17, 1
      %p34 = por %p32, %p33
      %p35 = scmp.ne.s32.totalorder %s27, %s30
      %p36 = scmp.eq.s32.totalorder %s17, 0
      %p37 = por %p35, %p36
      %p38 = scmp.ne.s32.totalorder %s27, %s30
      %p39 = scmp.eq.s32.totalorder %s22, 1
      %p40 = por %p38, %p39
      %p41 = scmp.ne.s32.totalorder %s30, %s31
      %p42 = scmp.eq.s32.totalorder %s22, 0
      %p43 = por %p41, %p42
      %p44 = scmp.ne.s32.totalorder %s30, %s31
      %p45 = scmp.eq.s32.totalorder %s23, 1
      %p46 = por %p44, %p45
      %p48 = scmp.ne.s32.totalorder %s31, %s47
      %p49 = scmp.eq.s32.totalorder %s23, 0
      %p50 = por %p48, %p49
      %s52 = sadd.s32 %s51, 1
      %p55 = scmp.eq.s32.totalorder %s17, 1
      %p56 = scmp.ne.s32.totalorder %s51, %s53
      %p57 = scmp.eq.s32.totalorder %s17, 0
      %p58 = por %p56, %p57
      %p59 = scmp.ne.s32.totalorder %s51, %s53
      %p60 = scmp.eq.s32.totalorder %s22, 1
      %p61 = por %p59, %p60
      %p62 = scmp.ne.s32.totalorder %s53, %s54
      %p63 = scmp.eq.s32.totalorder %s22, 0
      %p64 = por %p62, %p63
      %p65 = scmp.ne.s32.totalorder %s53, %s54
      %p66 = scmp.eq.s32.totalorder %s23, 1
      %p67 = por %p65, %p66
      %p69 = scmp.ne.s32.totalorder %s54, %s68
      %p70 = scmp.eq.s32.totalorder %s23, 0
      %p71 = por %p69, %p70
      %s73 = sadd.s32 %s72, 1
      %p76 = scmp.eq.s32.totalorder %s17, 1
      %p77 = scmp.ne.s32.totalorder %s72, %s74
      %p78 = scmp.eq.s32.totalorder %s17, 0
      %p79 = por %p77, %p78
      %p80 = scmp.ne.s32.totalorder %s72, %s74
      %p81 = scmp.eq.s32.totalorder %s22, 1
      %p82 = por %p80, %p81
      %p83 = scmp.ne.s32.totalorder %s74, %s75
      %p84 = scmp.eq.s32.totalorder %s22, 0
      %p85 = por %p83, %p84
      %p86 = scmp.ne.s32.totalorder %s74, %s75
      %p87 = scmp.eq.s32.totalorder %s23, 1
      %p88 = por %p86, %p87
      %p90 = scmp.ne.s32.totalorder %s75, %s89
      %p91 = scmp.eq.s32.totalorder %s23, 0
      %p92 = por %p90, %p91
      %s94 = sadd.s32 %s93, 1
      %p97 = scmp.eq.s32.totalorder %s17, 1
      %p98 = scmp.ne.s32.totalorder %s93, %s95
      %p99 = scmp.eq.s32.totalorder %s17, 0
      %p100 = por %p98, %p99
      %p101 = scmp.ne.s32.totalorder %s93, %s95
      %p102 = scmp.eq.s32.totalorder %s22, 1
      %p103 = por %p101, %p102
      %p104 = scmp.ne.s32.totalorder %s95, %s96
      %p105 = scmp.eq.s32.totalorder %s22, 0
      %p106 = por %p104, %p105
      %p107 = scmp.ne.s32.totalorder %s95, %s96
      %p108 = scmp.eq.s32.totalorder %s23, 1
      %p109 = por %p107, %p108
      %p111 = scmp.ne.s32.totalorder %s96, %s110
      %p112 = scmp.eq.s32.totalorder %s23, 0
      %p113 = por %p111, %p112
      %s115 = sadd.s32 %s114, 1
      %p118 = scmp.eq.s32.totalorder %s17, 1
      %p119 = scmp.ne.s32.totalorder %s114, %s116
      %p120 = scmp.eq.s32.totalorder %s17, 0
      %p121 = por %p119, %p120
      %p122 = scmp.ne.s32.totalorder %s114, %s116
      %p123 = scmp.eq.s32.totalorder %s22, 1
      %p124 = por %p122, %p123
      %p125 = scmp.ne.s32.totalorder %s116, %s117
      %p126 = scmp.eq.s32.totalorder %s22, 0
      %p127 = por %p125, %p126
      %p128 = scmp.ne.s32.totalorder %s116, %s117
      %p129 = scmp.eq.s32.totalorder %s23, 1
      %p130 = por %p128, %p129
      %p132 = scmp.ne.s32.totalorder %s117, %s131
      %p133 = scmp.eq.s32.totalorder %s23, 0
      %p134 = por %p132, %p133
      %s136 = sadd.s32 %s135, 1
      %p139 = scmp.eq.s32.totalorder %s17, 1
      %p140 = scmp.ne.s32.totalorder %s135, %s137
      %p141 = scmp.eq.s32.totalorder %s17, 0
      %p142 = por %p140, %p141
      %p143 = scmp.ne.s32.totalorder %s135, %s137
      %p144 = scmp.eq.s32.totalorder %s22, 1
      %p145 = por %p143, %p144
      %p146 = scmp.ne.s32.totalorder %s137, %s138
      %p147 = scmp.eq.s32.totalorder %s22, 0
      %p148 = por %p146, %p147
      %p149 = scmp.ne.s32.totalorder %s137, %s138
      %p150 = scmp.eq.s32.totalorder %s23, 1
      %p151 = por %p149, %p150
      %p153 = scmp.ne.s32.totalorder %s138, %s152
      %p154 = scmp.eq.s32.totalorder %s23, 0
      %p155 = por %p153, %p154
      %s156 = ssub.s32 %s17, %s24
      %p157 = scmp.eq.s32.totalorder %s156, 0
      %s159 = sadd.s32 %s158, 1
      %s160 = scalar_select %p157, %s158, %s159
      %p163 = pneg %p157
      %p164 = scmp.eq.s32.totalorder %s17, 1
      %p165 = por %p163, %p164
      %p166 = scmp.ne.s32.totalorder %s158, %s161
      %p167 = scmp.eq.s32.totalorder %s17, 0
      %p168 = por %p166, %p167
      %p169 = scmp.ne.s32.totalorder %s158, %s161
      %p170 = scmp.eq.s32.totalorder %s22, 1
      %p171 = por %p169, %p170
      %p172 = scmp.ne.s32.totalorder %s161, %s162
      %p173 = scmp.eq.s32.totalorder %s22, 0
      %p174 = por %p172, %p173
      %p175 = scmp.ne.s32.totalorder %s161, %s162
      %p176 = scmp.eq.s32.totalorder %s23, 1
      %p177 = por %p175, %p176
      %p179 = scmp.ne.s32.totalorder %s162, %s178
      %p180 = scmp.eq.s32.totalorder %s23, 0
      %p181 = por %p179, %p180
      %p182 = scmp.le.s32.totalorder 1, %s17
      %p183 = scmp.lt.s32.totalorder %s17, 3
      %p184 = pnand %p182, %p183
      %p185 = pneg %p184
      // Predicated region
      $region9: #{tpu_custom_call.1} parent=5 // pred_check
        _
      $region10: #{tpu_custom_call.1} parent=5 // pred_check_branch
        %187 = sbr.rel (%p184) target = $region12
      $region11: #{tpu_custom_call.1} parent=5 // pred_region
        %s188 = ssub.s32 %s17, 1
        // Predicated region
        $region13: #{tpu_custom_call.1} parent=11 // pred_check
          %p189 = pneg %p64
        $region14: #{tpu_custom_call.1} parent=11 // pred_check_branch
          %191 = sbr.rel (%p189) target = $region16
        $region15: #{tpu_custom_call.1} parent=11 // pred_region
          _
        $region16: #{tpu_custom_call.1} parent=11 // pred_fallthru
          _
        // Predicated region
        $region17: #{tpu_custom_call.1} parent=11 // pred_check
          %p192 = pneg %p85
        $region18: #{tpu_custom_call.1} parent=11 // pred_check_branch
          %194 = sbr.rel (%p192) target = $region20
        $region19: #{tpu_custom_call.1} parent=11 // pred_region
          %s196 = ssub.s32 6144, 6144
          %197 = vsyncadd [#allocation4], %s196
          %s198 = sshll.u32 [#allocation3], 4
          %s199 = int_to_ptr.vmem [resolvable:$true] %s198
          %204 = dma.hbm_to_vmem [thread:$0]  %s2, 6144, %s199, [#allocation4], 128, 128, 8
        $region20: #{tpu_custom_call.1} parent=11 // pred_fallthru
          _
        // Predicated region
        $region21: #{tpu_custom_call.1} parent=11 // pred_check
          %p205 = pneg %p106
        $region22: #{tpu_custom_call.1} parent=11 // pred_check_branch
          %207 = sbr.rel (%p205) target = $region24
        $region23: #{tpu_custom_call.1} parent=11 // pred_region
          _
        $region24: #{tpu_custom_call.1} parent=11 // pred_fallthru
          _
        // Predicated region
        $region25: #{tpu_custom_call.1} parent=11 // pred_check
          %p208 = pneg %p127
        $region26: #{tpu_custom_call.1} parent=11 // pred_check_branch
          %210 = sbr.rel (%p208) target = $region28
        $region27: #{tpu_custom_call.1} parent=11 // pred_region
          %s212 = ssub.s32 6144, 6144
          %213 = vsyncadd [#allocation7], %s212
          %s214 = sshll.u32 [#allocation6], 4
          %s215 = int_to_ptr.vmem [resolvable:$true] %s214
          %220 = dma.hbm_to_vmem [thread:$0]  %s4, 6144, %s215, [#allocation7], 128, 128, 8
        $region28: #{tpu_custom_call.1} parent=11 // pred_fallthru
          _
        // Predicated region
        $region29: #{tpu_custom_call.1} parent=11 // pred_check
          %p221 = pneg %p148
        $region30: #{tpu_custom_call.1} parent=11 // pred_check_branch
          %223 = sbr.rel (%p221) target = $region32
        $region31: #{tpu_custom_call.1} parent=11 // pred_region
          _
        $region32: #{tpu_custom_call.1} parent=11 // pred_fallthru
          _
      $region12: #{tpu_custom_call.1} parent=5 // pred_fallthru
        _
      %p224 = scmp.lt.s32.totalorder %s17, 2
      // Predicated region
      $region33: #{tpu_custom_call.1} parent=5 // pred_check
        %p225 = pneg %p224
      $region34: #{tpu_custom_call.1} parent=5 // pred_check_branch
        %227 = sbr.rel (%p225) target = $region36
      $region35: #{tpu_custom_call.1} parent=5 // pred_region
        // Predicated region
        $region37: #{tpu_custom_call.1} parent=35 // pred_check
          %p228 = pneg %p37
        $region38: #{tpu_custom_call.1} parent=35 // pred_check_branch
          %230 = sbr.rel (%p228) target = $region40
        $region39: #{tpu_custom_call.1} parent=35 // pred_region
          %p231 = scmp.lt.s32.totalorder %s17, 1
          %s232 = scalar_select %p231, %s17, 1
          %s233 = smul.addr %s232, 3
          %s234 = smul.addr %s233, 8
          %s235 = scalar_lea.vmem %s0, %s234
        $region40: #{tpu_custom_call.1} parent=35 // pred_fallthru
          _
      $region36: #{tpu_custom_call.1} parent=5 // pred_fallthru
        _
      %p236 = scmp.le.s32.totalorder 1, %s17
      %p237 = scmp.lt.s32.totalorder %s17, 3
      %p238 = pnand %p236, %p237
      %p239 = pneg %p238
      // Predicated region
      $region41: #{tpu_custom_call.1} parent=5 // pred_check
        _
      $region42: #{tpu_custom_call.1} parent=5 // pred_check_branch
        %241 = sbr.rel (%p238) target = $region44
      $region43: #{tpu_custom_call.1} parent=5 // pred_region
        %s242 = ssub.s32 %s17, 1
        // Predicated region
        $region45: #{tpu_custom_call.1} parent=43 // pred_check
          %p243 = pneg %p85
        $region46: #{tpu_custom_call.1} parent=43 // pred_check_branch
          %245 = sbr.rel (%p243) target = $region48
        $region47: #{tpu_custom_call.1} parent=43 // pred_region
          %246 = dma.done [#allocation4], 6144
        $region48: #{tpu_custom_call.1} parent=43 // pred_fallthru
          _
        // Predicated region
        $region49: #{tpu_custom_call.1} parent=43 // pred_check
          %p247 = pneg %p127
        $region50: #{tpu_custom_call.1} parent=43 // pred_check_branch
          %249 = sbr.rel (%p247) target = $region52
        $region51: #{tpu_custom_call.1} parent=43 // pred_region
          %250 = dma.done [#allocation7], 6144
        $region52: #{tpu_custom_call.1} parent=43 // pred_fallthru
          _
        %p251 = scmp.lt.s32.totalorder %s22, 1
        %s252 = scalar_select %p251, %s22, 1
        %s253 = smul.addr %s252, 3
        %s254 = smul.addr %s253, 8
        %s255 = scalar_lea.vmem %s0, %s254
        %p256 = pneg %p43
        %p257 = pneg %p40
        %p258 = pneg %p64
        %p259 = pneg %p61
        %p260 = pneg %p85
        %p261 = pneg %p82
        %p262 = pneg %p106
        %p263 = pneg %p103
        %p264 = pneg %p127
        %p265 = pneg %p124
        %p266 = pneg %p148
        %p267 = pneg %p145
        %p268 = pneg %p174
        %p269 = pneg %p171
        %s270 = sand.u32 %s161, 1
        %s271 = scalar_lea.sflag [#allocation5], %s270
        %s272 = sand.u32 %s161, 1
        %s273 = smul.addr %s272, 16
        %s274 = scalar_lea.vmem [#allocation8], %s273
        %p275 = scmp.lt.s32.totalorder %s22, 1
        %s276 = scalar_select %p275, %s22, 1
        %s277 = smul.addr %s276, 3
        %s278 = smul.addr %s277, 8
        %s279 = scalar_lea.vmem %s0, %s278
        %v280 = vld [vmem:[%s279] sm:$0xff]
        %v281 = vld [vmem:[%s279 + $0x8] sm:$0xff]
        %v282 = vld [vmem:[%s279 + $0x2] sm:$0xff]
        %v283 = vld [vmem:[%s279 + $0xa] sm:$0xff]
        %v284 = vld [vmem:[%s279 + $0x4] sm:$0xff]
        %v285 = vld [vmem:[%s279 + $0xc] sm:$0xff]
        %v286 = vld [vmem:[#allocation3] sm:$0xff]
        %v287 = vld [vmem:[#allocation3 + $0x8] sm:$0xff]
        %v288 = vld [vmem:[#allocation3 + $0x10] sm:$0xff]
        %v289 = vld [vmem:[#allocation3 + $0x18] sm:$0xff]
        %v290 = vld [vmem:[#allocation3 + $0x20] sm:$0xff]
        %v291 = vld [vmem:[#allocation3 + $0x28] sm:$0xff]
        %v292 = vld [vmem:[#allocation3 + $0x30] sm:$0xff]
        %v293 = vld [vmem:[#allocation3 + $0x38] sm:$0xff]
        %v294 = vld [vmem:[#allocation3 + $0x40] sm:$0xff]
        %v295 = vld [vmem:[#allocation3 + $0x48] sm:$0xff]
        %v296 = vld [vmem:[#allocation3 + $0x50] sm:$0xff]
        %v297 = vld [vmem:[#allocation3 + $0x58] sm:$0xff]
        %v298 = vld [vmem:[#allocation3 + $0x60] sm:$0xff]
        %v299 = vld [vmem:[#allocation3 + $0x68] sm:$0xff]
        %v300 = vld [vmem:[#allocation3 + $0x70] sm:$0xff]
        %v301 = vld [vmem:[#allocation3 + $0x78] sm:$0xff]
        %v302 = vld [vmem:[#allocation3 + $0x80] sm:$0xff]
        %v303 = vld [vmem:[#allocation3 + $0x88] sm:$0xff]
        %v304 = vld [vmem:[#allocation3 + $0x90] sm:$0xff]
        %v305 = vld [vmem:[#allocation3 + $0x98] sm:$0xff]
        %v306 = vld [vmem:[#allocation3 + $0xa0] sm:$0xff]
        %v307 = vld [vmem:[#allocation3 + $0xa8] sm:$0xff]
        %v308 = vld [vmem:[#allocation3 + $0xb0] sm:$0xff]
        %v309 = vld [vmem:[#allocation3 + $0xb8] sm:$0xff]
        %v310 = vld [vmem:[#allocation3 + $0xc0] sm:$0xff]
        %v311 = vld [vmem:[#allocation3 + $0xc8] sm:$0xff]
        %v312 = vld [vmem:[#allocation3 + $0xd0] sm:$0xff]
        %v313 = vld [vmem:[#allocation3 + $0xd8] sm:$0xff]
        %v314 = vld [vmem:[#allocation3 + $0xe0] sm:$0xff]
        %v315 = vld [vmem:[#allocation3 + $0xe8] sm:$0xff]
        %v316 = vld [vmem:[#allocation3 + $0xf0] sm:$0xff]
        %v317 = vld [vmem:[#allocation3 + $0xf8] sm:$0xff]
        %v318 = vld [vmem:[#allocation3 + $0x100] sm:$0xff]
        %v319 = vld [vmem:[#allocation3 + $0x108] sm:$0xff]
        %v320 = vld [vmem:[#allocation3 + $0x110] sm:$0xff]
        %v321 = vld [vmem:[#allocation3 + $0x118] sm:$0xff]
        %v322 = vld [vmem:[#allocation3 + $0x120] sm:$0xff]
        %v323 = vld [vmem:[#allocation3 + $0x128] sm:$0xff]
        %v324 = vld [vmem:[#allocation3 + $0x130] sm:$0xff]
        %v325 = vld [vmem:[#allocation3 + $0x138] sm:$0xff]
        %v326 = vld [vmem:[#allocation3 + $0x140] sm:$0xff]
        %v327 = vld [vmem:[#allocation3 + $0x148] sm:$0xff]
        %v328 = vld [vmem:[#allocation3 + $0x150] sm:$0xff]
        %v329 = vld [vmem:[#allocation3 + $0x158] sm:$0xff]
        %v330 = vld [vmem:[#allocation3 + $0x160] sm:$0xff]
        %v331 = vld [vmem:[#allocation3 + $0x168] sm:$0xff]
        %v332 = vld [vmem:[#allocation3 + $0x170] sm:$0xff]
        %v333 = vld [vmem:[#allocation3 + $0x178] sm:$0xff]
        %v334 = vld [vmem:[%s3] sm:$0x1]
        %v336 = vlaneseq
        %v337 = vshrl.u32 %v336, 7
        %v338 = vsub.s32 0, %v337
        %v339 = vrot.slane %v334, %v338
        %341 = vmatprep.subr.mxu0 0.0
        %342 = vmatpush1.msra.mxu0 %v286
        %343 = vmatprep.subr.mxu0 0.0
        %344 = vmatpush1.msra.mxu0 %v287
        %345 = vmatprep.subr.mxu0 0.0
        %346 = vmatpush1.msra.mxu0 %v288
        %347 = vmatprep.subr.mxu0 0.0
        %348 = vmatpush1.msra.mxu0 %v289
        %349 = vmatprep.subr.mxu0 0.0
        %350 = vmatpush1.msra.mxu0 %v290
        %351 = vmatprep.subr.mxu0 0.0
        %352 = vmatpush1.msra.mxu0 %v291
        %353 = vmatprep.subr.mxu0 0.0
        %354 = vmatpush1.msra.mxu0 %v292
        %355 = vmatprep.subr.mxu0 0.0
        %356 = vmatpush1.msra.mxu0 %v293
        %357 = vmatprep.subr.mxu0 0.0
        %358 = vmatpush1.msra.mxu0 %v294
        %359 = vmatprep.subr.mxu0 0.0
        %360 = vmatpush1.msra.mxu0 %v295
        %361 = vmatprep.subr.mxu0 0.0
        %362 = vmatpush1.msra.mxu0 %v296
        %363 = vmatprep.subr.mxu0 0.0
        %364 = vmatpush1.msra.mxu0 %v297
        %365 = vmatprep.subr.mxu0 0.0
        %366 = vmatpush1.msra.mxu0 %v298
        %367 = vmatprep.subr.mxu0 0.0
        %368 = vmatpush1.msra.mxu0 %v299
        %369 = vmatprep.subr.mxu0 0.0
        %370 = vmatpush1.msra.mxu0 %v300
        %371 = vmatprep.subr.mxu0 0.0
        %372 = vmatpush1.msra.mxu0 %v301
        %373 = vmatprep.subr.mxu0 0.0
        %374 = vmatpush1.msra.mxu0 %v302
        %375 = vmatprep.subr.mxu0 0.0
        %376 = vmatpush1.msra.mxu0 %v303
        %377 = vmatprep.subr.mxu0 0.0
        %378 = vmatpush1.msra.mxu0 %v304
        %379 = vmatprep.subr.mxu0 0.0
        %380 = vmatpush1.msra.mxu0 %v305
        %381 = vmatprep.subr.mxu0 0.0
        %382 = vmatpush1.msra.mxu0 %v306
        %383 = vmatprep.subr.mxu0 0.0
        %384 = vmatpush1.msra.mxu0 %v307
        %385 = vmatprep.subr.mxu0 0.0
        %386 = vmatpush1.msra.mxu0 %v308
        %387 = vmatprep.subr.mxu0 0.0
        %388 = vmatpush1.msra.mxu0 %v309
        %389 = vmatprep.subr.mxu0 0.0
        %390 = vmatpush1.msra.mxu0 %v310
        %391 = vmatprep.subr.mxu0 0.0
        %392 = vmatpush1.msra.mxu0 %v311
        %393 = vmatprep.subr.mxu0 0.0
        %394 = vmatpush1.msra.mxu0 %v312
        %395 = vmatprep.subr.mxu0 0.0
        %396 = vmatpush1.msra.mxu0 %v313
        %397 = vmatprep.subr.mxu0 0.0
        %398 = vmatpush1.msra.mxu0 %v314
        %399 = vmatprep.subr.mxu0 0.0
        %400 = vmatpush1.msra.mxu0 %v315
        %401 = vmatprep.subr.mxu0 0.0
        %402 = vmatpush1.msra.mxu0 %v316
        %403 = vmatprep.subr.mxu0 0.0
        %404 = vmatpush1.msra.mxu0 %v317
        %405 = vmatprep.mubr.f32.mxu0 %v282
        %406 = vmatmul.mubr.f32.gmra.mrb[0].mxu0 %v280
        %v407 = vpop.f32.mrb[0].mxu0
        %v408 = vadd.f32 %v339, %v407
        %v409 = vpop.f32.mrb[0].mxu0
        %410 = vmatprep.mubr.f32.mxu0 %v283
        %411 = vmatmul.mubr.f32.gmra.mrb[0].mxu0 %v281
        %v412 = vpop.f32.mrb[0].mxu0
        %v413 = vadd.f32 %v339, %v412
        %v414 = vpop.f32.mrb[0].mxu0
        %415 = vdwg.mxu0
        %416 = vmatprep.subr.mxu0 0.0
        %417 = vmatpush1.msra.mxu0 %v318
        %418 = vmatprep.subr.mxu0 0.0
        %419 = vmatpush1.msra.mxu0 %v319
        %420 = vmatprep.subr.mxu0 0.0
        %421 = vmatpush1.msra.mxu0 %v320
        %422 = vmatprep.subr.mxu0 0.0
        %423 = vmatpush1.msra.mxu0 %v321
        %424 = vmatprep.subr.mxu0 0.0
        %425 = vmatpush1.msra.mxu0 %v322
        %426 = vmatprep.subr.mxu0 0.0
        %427 = vmatpush1.msra.mxu0 %v323
        %428 = vmatprep.subr.mxu0 0.0
        %429 = vmatpush1.msra.mxu0 %v324
        %430 = vmatprep.subr.mxu0 0.0
        %431 = vmatpush1.msra.mxu0 %v325
        %432 = vmatprep.subr.mxu0 0.0
        %433 = vmatpush1.msra.mxu0 %v326
        %434 = vmatprep.subr.mxu0 0.0
        %435 = vmatpush1.msra.mxu0 %v327
        %436 = vmatprep.subr.mxu0 0.0
        %437 = vmatpush1.msra.mxu0 %v328
        %438 = vmatprep.subr.mxu0 0.0
        %439 = vmatpush1.msra.mxu0 %v329
        %440 = vmatprep.subr.mxu0 0.0
        %441 = vmatpush1.msra.mxu0 %v330
        %442 = vmatprep.subr.mxu0 0.0
        %443 = vmatpush1.msra.mxu0 %v331
        %444 = vmatprep.subr.mxu0 0.0
        %445 = vmatpush1.msra.mxu0 %v332
        %446 = vmatprep.subr.mxu0 0.0
        %447 = vmatpush1.msra.mxu0 %v333
        %448 = vmatprep.subr.mxu0 0.0
        %449 = vmatpush1.msra.mxu0 0.0
        %450 = vmatprep.subr.mxu0 0.0
        %451 = vmatpush1.msra.mxu0 0.0
        %452 = vmatprep.subr.mxu0 0.0
        %453 = vmatpush1.msra.mxu0 0.0
        %454 = vmatprep.subr.mxu0 0.0
        %455 = vmatpush1.msra.mxu0 0.0
        %456 = vmatprep.subr.mxu0 0.0
        %457 = vmatpush1.msra.mxu0 0.0
        %458 = vmatprep.subr.mxu0 0.0
        %459 = vmatpush1.msra.mxu0 0.0
        %460 = vmatprep.subr.mxu0 0.0
        %461 = vmatpush1.msra.mxu0 0.0
        %462 = vmatprep.subr.mxu0 0.0
        %463 = vmatpush1.msra.mxu0 0.0
        %464 = vmatprep.subr.mxu0 0.0
        %465 = vmatpush1.msra.mxu0 0.0
        %466 = vmatprep.subr.mxu0 0.0
        %467 = vmatpush1.msra.mxu0 0.0
        %468 = vmatprep.subr.mxu0 0.0
        %469 = vmatpush1.msra.mxu0 0.0
        %470 = vmatprep.subr.mxu0 0.0
        %471 = vmatpush1.msra.mxu0 0.0
        %472 = vmatprep.subr.mxu0 0.0
        %473 = vmatpush1.msra.mxu0 0.0
        %474 = vmatprep.subr.mxu0 0.0
        %475 = vmatpush1.msra.mxu0 0.0
        %476 = vmatprep.subr.mxu0 0.0
        %477 = vmatpush1.msra.mxu0 0.0
        %478 = vmatprep.subr.mxu0 0.0
        %479 = vmatpush1.msra.mxu0 0.0
        %480 = vmatprep.mubr.f32.mxu0 0.0
        %481 = vmatmul.mubr.f32.gmra.mrb[0].mxu0 %v284
        %v482 = vpop.f32.mrb[0].mxu0
        %v483 = vadd.f32 %v408, %v482
        %v484 = vpop.f32.mrb[0].mxu0
        %485 = vmatprep.mubr.f32.mxu0 0.0
        %486 = vmatmul.mubr.f32.gmra.mrb[0].mxu0 %v285
        %v487 = vpop.f32.mrb[0].mxu0
        %v488 = vadd.f32 %v413, %v487
        %v489 = vpop.f32.mrb[0].mxu0
        %490 = vdwg.mxu0
        %v491 = vmax.f32 %v483, 0.0
        %v492 = vmax.f32 %v488, 0.0
        %493 = vst [vmem:[#allocation2] sm:$0x3] 0.0
        %494 = vst [vmem:[#allocation2 + $0x12] sm:$0x3] 0.0
        %495 = vst [vmem:[#allocation2 + $0x2] sm:$0xff] %v491
        %496 = vst [vmem:[#allocation2 + $0xa] sm:$0xff] %v492
        %v497 = vld [vmem:[#allocation2] sm:$0xff]
        %v498 = vld [vmem:[#allocation2 + $0x8] sm:$0xff]
        %v499 = vld [vmem:[#allocation2 + $0x2] sm:$0xff]
        %v500 = vld [vmem:[#allocation2 + $0xa] sm:$0xff]
        %v501 = vld [vmem:[#allocation2 + $0x4] sm:$0xff]
        %v502 = vld [vmem:[#allocation2 + $0xc] sm:$0xff]
        %v503 = vld [vmem:[#allocation6] sm:$0xff]
        %v504 = vld [vmem:[#allocation6 + $0x8] sm:$0xff]
        %v505 = vld [vmem:[#allocation6 + $0x10] sm:$0xff]
        %v506 = vld [vmem:[#allocation6 + $0x18] sm:$0xff]
        %v507 = vld [vmem:[#allocation6 + $0x20] sm:$0xff]
        %v508 = vld [vmem:[#allocation6 + $0x28] sm:$0xff]
        %v509 = vld [vmem:[#allocation6 + $0x30] sm:$0xff]
        %v510 = vld [vmem:[#allocation6 + $0x38] sm:$0xff]
        %v511 = vld [vmem:[#allocation6 + $0x40] sm:$0xff]
        %v512 = vld [vmem:[#allocation6 + $0x48] sm:$0xff]
        %v513 = vld [vmem:[#allocation6 + $0x50] sm:$0xff]
        %v514 = vld [vmem:[#allocation6 + $0x58] sm:$0xff]
        %v515 = vld [vmem:[#allocation6 + $0x60] sm:$0xff]
        %v516 = vld [vmem:[#allocation6 + $0x68] sm:$0xff]
        %v517 = vld [vmem:[#allocation6 + $0x70] sm:$0xff]
        %v518 = vld [vmem:[#allocation6 + $0x78] sm:$0xff]
        %v519 = vld [vmem:[#allocation6 + $0x80] sm:$0xff]
        %v520 = vld [vmem:[#allocation6 + $0x88] sm:$0xff]
        %v521 = vld [vmem:[#allocation6 + $0x90] sm:$0xff]
        %v522 = vld [vmem:[#allocation6 + $0x98] sm:$0xff]
        %v523 = vld [vmem:[#allocation6 + $0xa0] sm:$0xff]
        %v524 = vld [vmem:[#allocation6 + $0xa8] sm:$0xff]
        %v525 = vld [vmem:[#allocation6 + $0xb0] sm:$0xff]
        %v526 = vld [vmem:[#allocation6 + $0xb8] sm:$0xff]
        %v527 = vld [vmem:[#allocation6 + $0xc0] sm:$0xff]
        %v528 = vld [vmem:[#allocation6 + $0xc8] sm:$0xff]
        %v529 = vld [vmem:[#allocation6 + $0xd0] sm:$0xff]
        %v530 = vld [vmem:[#allocation6 + $0xd8] sm:$0xff]
        %v531 = vld [vmem:[#allocation6 + $0xe0] sm:$0xff]
        %v532 = vld [vmem:[#allocation6 + $0xe8] sm:$0xff]
        %v533 = vld [vmem:[#allocation6 + $0xf0] sm:$0xff]
        %v534 = vld [vmem:[#allocation6 + $0xf8] sm:$0xff]
        %v535 = vld [vmem:[#allocation6 + $0x100] sm:$0xff]
        %v536 = vld [vmem:[#allocation6 + $0x108] sm:$0xff]
        %v537 = vld [vmem:[#allocation6 + $0x110] sm:$0xff]
        %v538 = vld [vmem:[#allocation6 + $0x118] sm:$0xff]
        %v539 = vld [vmem:[#allocation6 + $0x120] sm:$0xff]
        %v540 = vld [vmem:[#allocation6 + $0x128] sm:$0xff]
        %v541 = vld [vmem:[#allocation6 + $0x130] sm:$0xff]
        %v542 = vld [vmem:[#allocation6 + $0x138] sm:$0xff]
        %v543 = vld [vmem:[#allocation6 + $0x140] sm:$0xff]
        %v544 = vld [vmem:[#allocation6 + $0x148] sm:$0xff]
        %v545 = vld [vmem:[#allocation6 + $0x150] sm:$0xff]
        %v546 = vld [vmem:[#allocation6 + $0x158] sm:$0xff]
        %v547 = vld [vmem:[#allocation6 + $0x160] sm:$0xff]
        %v548 = vld [vmem:[#allocation6 + $0x168] sm:$0xff]
        %v549 = vld [vmem:[#allocation6 + $0x170] sm:$0xff]
        %v550 = vld [vmem:[#allocation6 + $0x178] sm:$0xff]
        %v551 = vld [vmem:[%s5] sm:$0x1]
        %v553 = vlaneseq
        %v554 = vshrl.u32 %v553, 7
        %v555 = vsub.s32 0, %v554
        %v556 = vrot.slane %v551, %v555
        %558 = vmatprep.subr.mxu0 0.0
        %559 = vmatpush1.msra.mxu0 %v503
        %560 = vmatprep.subr.mxu0 0.0
        %561 = vmatpush1.msra.mxu0 %v504
        %562 = vmatprep.subr.mxu0 0.0
        %563 = vmatpush1.msra.mxu0 %v505
        %564 = vmatprep.subr.mxu0 0.0
        %565 = vmatpush1.msra.mxu0 %v506
        %566 = vmatprep.subr.mxu0 0.0
        %567 = vmatpush1.msra.mxu0 %v507
        %568 = vmatprep.subr.mxu0 0.0
        %569 = vmatpush1.msra.mxu0 %v508
        %570 = vmatprep.subr.mxu0 0.0
        %571 = vmatpush1.msra.mxu0 %v509
        %572 = vmatprep.subr.mxu0 0.0
        %573 = vmatpush1.msra.mxu0 %v510
        %574 = vmatprep.subr.mxu0 0.0
        %575 = vmatpush1.msra.mxu0 %v511
        %576 = vmatprep.subr.mxu0 0.0
        %577 = vmatpush1.msra.mxu0 %v512
        %578 = vmatprep.subr.mxu0 0.0
        %579 = vmatpush1.msra.mxu0 %v513
        %580 = vmatprep.subr.mxu0 0.0
        %581 = vmatpush1.msra.mxu0 %v514
        %582 = vmatprep.subr.mxu0 0.0
        %583 = vmatpush1.msra.mxu0 %v515
        %584 = vmatprep.subr.mxu0 0.0
        %585 = vmatpush1.msra.mxu0 %v516
        %586 = vmatprep.subr.mxu0 0.0
        %587 = vmatpush1.msra.mxu0 %v517
        %588 = vmatprep.subr.mxu0 0.0
        %589 = vmatpush1.msra.mxu0 %v518
        %590 = vmatprep.subr.mxu0 0.0
        %591 = vmatpush1.msra.mxu0 %v519
        %592 = vmatprep.subr.mxu0 0.0
        %593 = vmatpush1.msra.mxu0 %v520
        %594 = vmatprep.subr.mxu0 0.0
        %595 = vmatpush1.msra.mxu0 %v521
        %596 = vmatprep.subr.mxu0 0.0
        %597 = vmatpush1.msra.mxu0 %v522
        %598 = vmatprep.subr.mxu0 0.0
        %599 = vmatpush1.msra.mxu0 %v523
        %600 = vmatprep.subr.mxu0 0.0
        %601 = vmatpush1.msra.mxu0 %v524
        %602 = vmatprep.subr.mxu0 0.0
        %603 = vmatpush1.msra.mxu0 %v525
        %604 = vmatprep.subr.mxu0 0.0
        %605 = vmatpush1.msra.mxu0 %v526
        %606 = vmatprep.subr.mxu0 0.0
        %607 = vmatpush1.msra.mxu0 %v527
        %608 = vmatprep.subr.mxu0 0.0
        %609 = vmatpush1.msra.mxu0 %v528
        %610 = vmatprep.subr.mxu0 0.0
        %611 = vmatpush1.msra.mxu0 %v529
        %612 = vmatprep.subr.mxu0 0.0
        %613 = vmatpush1.msra.mxu0 %v530
        %614 = vmatprep.subr.mxu0 0.0
        %615 = vmatpush1.msra.mxu0 %v531
        %616 = vmatprep.subr.mxu0 0.0
        %617 = vmatpush1.msra.mxu0 %v532
        %618 = vmatprep.subr.mxu0 0.0
        %619 = vmatpush1.msra.mxu0 %v533
        %620 = vmatprep.subr.mxu0 0.0
        %621 = vmatpush1.msra.mxu0 %v534
        %622 = vmatprep.mubr.f32.mxu0 %v499
        %623 = vmatmul.mubr.f32.gmra.mrb[0].mxu0 %v497
        %v624 = vpop.f32.mrb[0].mxu0
        %v625 = vadd.f32 %v556, %v624
        %v626 = vpop.f32.mrb[0].mxu0
        %627 = vmatprep.mubr.f32.mxu0 %v500
        %628 = vmatmul.mubr.f32.gmra.mrb[0].mxu0 %v498
        %v629 = vpop.f32.mrb[0].mxu0
        %v630 = vadd.f32 %v556, %v629
        %v631 = vpop.f32.mrb[0].mxu0
        %632 = vdwg.mxu0
        %633 = vmatprep.subr.mxu0 0.0
        %634 = vmatpush1.msra.mxu0 %v535
        %635 = vmatprep.subr.mxu0 0.0
        %636 = vmatpush1.msra.mxu0 %v536
        %637 = vmatprep.subr.mxu0 0.0
        %638 = vmatpush1.msra.mxu0 %v537
        %639 = vmatprep.subr.mxu0 0.0
        %640 = vmatpush1.msra.mxu0 %v538
        %641 = vmatprep.subr.mxu0 0.0
        %642 = vmatpush1.msra.mxu0 %v539
        %643 = vmatprep.subr.mxu0 0.0
        %644 = vmatpush1.msra.mxu0 %v540
        %645 = vmatprep.subr.mxu0 0.0
        %646 = vmatpush1.msra.mxu0 %v541
        %647 = vmatprep.subr.mxu0 0.0
        %648 = vmatpush1.msra.mxu0 %v542
        %649 = vmatprep.subr.mxu0 0.0
        %650 = vmatpush1.msra.mxu0 %v543
        %651 = vmatprep.subr.mxu0 0.0
        %652 = vmatpush1.msra.mxu0 %v544
        %653 = vmatprep.subr.mxu0 0.0
        %654 = vmatpush1.msra.mxu0 %v545
        %655 = vmatprep.subr.mxu0 0.0
        %656 = vmatpush1.msra.mxu0 %v546
        %657 = vmatprep.subr.mxu0 0.0
        %658 = vmatpush1.msra.mxu0 %v547
        %659 = vmatprep.subr.mxu0 0.0
        %660 = vmatpush1.msra.mxu0 %v548
        %661 = vmatprep.subr.mxu0 0.0
        %662 = vmatpush1.msra.mxu0 %v549
        %663 = vmatprep.subr.mxu0 0.0
        %664 = vmatpush1.msra.mxu0 %v550
        %665 = vmatprep.subr.mxu0 0.0
        %666 = vmatpush1.msra.mxu0 0.0
        %667 = vmatprep.subr.mxu0 0.0
        %668 = vmatpush1.msra.mxu0 0.0
        %669 = vmatprep.subr.mxu0 0.0
        %670 = vmatpush1.msra.mxu0 0.0
        %671 = vmatprep.subr.mxu0 0.0
        %672 = vmatpush1.msra.mxu0 0.0
        %673 = vmatprep.subr.mxu0 0.0
        %674 = vmatpush1.msra.mxu0 0.0
        %675 = vmatprep.subr.mxu0 0.0
        %676 = vmatpush1.msra.mxu0 0.0
        %677 = vmatprep.subr.mxu0 0.0
        %678 = vmatpush1.msra.mxu0 0.0
        %679 = vmatprep.subr.mxu0 0.0
        %680 = vmatpush1.msra.mxu0 0.0
        %681 = vmatprep.subr.mxu0 0.0
        %682 = vmatpush1.msra.mxu0 0.0
        %683 = vmatprep.subr.mxu0 0.0
        %684 = vmatpush1.msra.mxu0 0.0
        %685 = vmatprep.subr.mxu0 0.0
        %686 = vmatpush1.msra.mxu0 0.0
        %687 = vmatprep.subr.mxu0 0.0
        %688 = vmatpush1.msra.mxu0 0.0
        %689 = vmatprep.subr.mxu0 0.0
        %690 = vmatpush1.msra.mxu0 0.0
        %691 = vmatprep.subr.mxu0 0.0
        %692 = vmatpush1.msra.mxu0 0.0
        %693 = vmatprep.subr.mxu0 0.0
        %694 = vmatpush1.msra.mxu0 0.0
        %695 = vmatprep.subr.mxu0 0.0
        %696 = vmatpush1.msra.mxu0 0.0
        %697 = vmatprep.mubr.f32.mxu0 0.0
        %698 = vmatmul.mubr.f32.gmra.mrb[0].mxu0 %v501
        %v699 = vpop.f32.mrb[0].mxu0
        %v700 = vadd.f32 %v625, %v699
        %v701 = vpop.f32.mrb[0].mxu0
        %702 = vmatprep.mubr.f32.mxu0 0.0
        %703 = vmatmul.mubr.f32.gmra.mrb[0].mxu0 %v502
        %v704 = vpop.f32.mrb[0].mxu0
        %v705 = vadd.f32 %v630, %v704
        %v706 = vpop.f32.mrb[0].mxu0
        %707 = vdwg.mxu0
        %v708 = vld [vmem:[%s279 + $0x2] sm:$0xff]
        %v709 = vld [vmem:[%s279 + $0xa] sm:$0xff]
        %v710 = vadd.f32 %v700, %v708
        %v711 = vadd.f32 %v705, %v709
        %v712 = vmax.f32 %v710, 0.0
        %v713 = vmax.f32 %v711, 0.0
        %714 = vst [vmem:[%s274] sm:$0xff] %v712
        %715 = vst [vmem:[%s274 + $0x8] sm:$0xff] %v713
        %s716 = sand.u32 %s161, 1
        %s717 = scalar_lea.sflag [#allocation5], %s716
        %s718 = sand.u32 %s161, 1
        %s719 = smul.addr %s718, 16
        %s720 = scalar_lea.vmem [#allocation8], %s719
        // Predicated region
        $region53: #{tpu_custom_call.1} parent=43 // pred_check
          %p721 = pneg %p171
        $region54: #{tpu_custom_call.1} parent=43 // pred_check_branch
          %723 = sbr.rel (%p721) target = $region56
        $region55: #{tpu_custom_call.1} parent=43 // pred_region
          %s725 = ssub.s32 256, 256
          %726 = vsyncadd %s717, %s725
          %s727 = smul.addr %s22, 2
          %s728 = smul.addr %s727, 128
          %s729 = scalar_lea.hbm %s6, %s728
          %s730 = sshll.u32 %s720, 4
          %s731 = int_to_ptr.vmem [resolvable:$true] %s730
          %736 = dma.vmem_to_hbm [thread:$0]  %s731, 256, %s729, %s717, 128, 128, 8
        $region56: #{tpu_custom_call.1} parent=43 // pred_fallthru
          _
      $region44: #{tpu_custom_call.1} parent=5 // pred_fallthru
        _
      %p737 = scmp.le.s32.totalorder 2, %s17
      // Predicated region
      $region57: #{tpu_custom_call.1} parent=5 // pred_check
        %p738 = pneg %p737
      $region58: #{tpu_custom_call.1} parent=5 // pred_check_branch
        %740 = sbr.rel (%p738) target = $region60
      $region59: #{tpu_custom_call.1} parent=5 // pred_region
        %s741 = ssub.s32 %s17, 2
        // Predicated region
        $region61: #{tpu_custom_call.1} parent=59 // pred_check
          %p742 = pneg %p177
        $region62: #{tpu_custom_call.1} parent=59 // pred_check_branch
          %744 = sbr.rel (%p742) target = $region64
        $region63: #{tpu_custom_call.1} parent=59 // pred_region
          %s745 = sand.u32 %s162, 1
          %s746 = scalar_lea.sflag [#allocation5], %s745
          %s747 = sand.u32 %s162, 1
          %s748 = smul.addr %s747, 16
          %s749 = scalar_lea.vmem [#allocation8], %s748
          %750 = dma.done %s746, 256
        $region64: #{tpu_custom_call.1} parent=59 // pred_fallthru
          _
      $region60: #{tpu_custom_call.1} parent=5 // pred_fallthru
        _
    $region6: #{tpu_custom_call.1} parent=1 // loop_footer
      %s21 = sadd.s32 1, %s17
    $region7: #{tpu_custom_call.1} parent=1 // loop_footer_branch
      %16 = sbr.rel target = $region3
    $region8: #{tpu_custom_call.1} parent=1 // loop_exit
      _
    %751 = vsyncpa [#allocation4], 1
    %s752 = scalar_lea.sflag [#allocation4], 1
    %753 = vsyncpa %s752, 1
    %754 = vsyncpa [#allocation7], 1
    %755 = vsyncpa [#allocation5], 1
    %s756 = scalar_lea.sflag [#allocation5], 1
    %757 = vsyncpa %s756, 1

</llo_original>
